<compile_context>
chip_gen: v7x
topology: tpu7x:2x2x1
jax: 0.10.0
libtpu: 0.0.40
codegen_flags: <defaults>
</compile_context>

<pallas_src>
import functools
import math

import jax
import jax.numpy as jnp
from jax import lax
from jax.experimental import pallas as pl
from jax.experimental.pallas import tpu as pltpu


# ----------------------------- attention core ------------------------------ #
def _attend_one(Qb, Kb, Vb, wo_ref, num_heads):
    """Per-batch attention. Qb: (S, E) f32 (scale already folded), Kb/Vb: (Sk, E) f32.
    Returns the (S, E) f32 output-projection accumulator (no bias, no residual)."""
    S, E = Qb.shape
    D = E // num_heads                       # lane-dense head_dim (128 here)
    acc = jnp.zeros((S, E), jnp.float32)
    for h in range(num_heads):               # static unroll (tiny H at test shape)
        cs = slice(h * D, (h + 1) * D)
        qh = Qb[:, cs].astype(jnp.bfloat16)                       # (S, D)
        kh = Kb[:, cs].astype(jnp.bfloat16)                       # (Sk, D)
        vh = Vb[:, cs].astype(jnp.bfloat16)                       # (Sk, D)
        # scores = qh @ kh^T (contract last dims; no materialized transpose)
        s = lax.dot_general(qh, kh, (((1,), (1,)), ((), ())),
                            preferred_element_type=jnp.float32)   # (S, Sk)
        s = s - s.max(axis=-1, keepdims=True)
        p = jnp.exp(s)
        l = p.sum(axis=-1, keepdims=True)                         # (S, 1)
        ctx = jnp.dot(p.astype(jnp.bfloat16), vh,
                      preferred_element_type=jnp.float32)         # (S, D)
        ctx = ctx * pl.reciprocal(l, approx=True)                 # deferred softmax norm (EUP)
        # Accumulate the output projection per head; wo_ref slice is a free view.
        acc = acc + jnp.dot(ctx.astype(jnp.bfloat16),
                            wo_ref[h * D:(h + 1) * D, :],
                            preferred_element_type=jnp.float32)
    return acc


# ------------------------------ Pallas kernels ------------------------------ #
def mha_self_kernel(x_ref, res_ref, wqkv_ref, wo_ref, bqkv_ref, bo_ref, o_ref,
                    *, num_heads):
    """Fused self-attention (query == key == value). x/res/o: (Bt, S, E);
    wqkv: (E, 3E) bf16 (Q columns pre-scaled); wo: (E, E) bf16; biases f32."""
    Bt, S, E = x_ref.shape
    # Single packed projection GEMM over all Bt*S rows (free reshape: S % 8 == 0).
    x2d = x_ref[...].reshape(Bt * S, E)
    qkv = jnp.dot(x2d, wqkv_ref[...],
                  preferred_element_type=jnp.float32) + bqkv_ref[...]   # (Bt*S, 3E)
    for b in range(Bt):
        r = slice(b * S, (b + 1) * S)
        acc = _attend_one(qkv[r, 0:E], qkv[r, E:2 * E], qkv[r, 2 * E:3 * E],
                          wo_ref, num_heads)
        o_ref[b] = (res_ref[b] + acc + bo_ref[...]).astype(o_ref.dtype)


def mha_cross_kernel(q_ref, k_ref, v_ref, res_ref, wqkv_ref, wo_ref,
                     bqkv_ref, bo_ref, o_ref, *, num_heads):
    """General path (query/key/value differ, e.g. positional encodings or
    cross-attention). Same packed parameters, three projection GEMMs."""
    Bt, S, E = q_ref.shape
    Sk = k_ref.shape[1]
    q2d = q_ref[...].reshape(Bt * S, E)
    k2d = k_ref[...].reshape(Bt * Sk, E)
    v2d = v_ref[...].reshape(Bt * Sk, E)
    Q = jnp.dot(q2d, wqkv_ref[:, 0:E],
                preferred_element_type=jnp.float32) + bqkv_ref[:, 0:E]
    K = jnp.dot(k2d, wqkv_ref[:, E:2 * E],
                preferred_element_type=jnp.float32) + bqkv_ref[:, E:2 * E]
    V = jnp.dot(v2d, wqkv_ref[:, 2 * E:3 * E],
                preferred_element_type=jnp.float32) + bqkv_ref[:, 2 * E:3 * E]
    for b in range(Bt):
        rq = slice(b * S, (b + 1) * S)
        rk = slice(b * Sk, (b + 1) * Sk)
        acc = _attend_one(Q[rq], K[rk], V[rk], wo_ref, num_heads)
        o_ref[b] = (res_ref[b] + acc + bo_ref[...]).astype(o_ref.dtype)


# --------------------------------- wrapper ----------------------------------- #
def _pick_batch_block(batch, seq):
    """Largest divisor of `batch` giving ~>=256 projection rows per grid step,
    while keeping >= 2 grid steps when batch >= 2 (both v7x TensorCores get
    work). On 1-TC v5e/v6e pass batch_block=batch to merge the serial grid."""
    target = max(1, (256 + seq - 1) // seq)
    best = 1
    for bt in range(1, batch + 1):
        if batch % bt:
            continue
        if bt > target:
            break
        if batch // bt >= 2 or batch == 1:
            best = bt
    return best


def multihead_attention(x, params, key=None, value=None, residual=None,
                        query_pos=None, key_pos=None,
                        attn_mask=None, key_padding_mask=None,
                        batch_block=None):
    """Forward of the mmcls MultiheadAttention wrapper.

    x: (num_query, bs, embed_dims) f32 (same layout as torch.nn.MultiheadAttention).
    Returns (num_query, bs, embed_dims) f32 = residual + attn(query, key, value).
    """
    assert attn_mask is None and key_padding_mask is None  # TODO(synk): masks unsupported.

    query = x
    if key is None:
        key = query
    if value is None:
        value = key
    if residual is None:
        residual = x
    if key_pos is None and query_pos is not None and query_pos.shape == key.shape:
        key_pos = query_pos
    # Fully-fused single-GEMM path only valid when q == k == v (ViT backbone usage).
    self_attn = (key is query) and (value is query) and \
                (query_pos is None) and (key_pos is None)
    if query_pos is not None:
        query = query + query_pos
    if key_pos is not None:
        key = key + key_pos

    S, B, E = query.shape
    H = params["num_heads"]
    assert E % H == 0

    Bt = batch_block if batch_block is not None else _pick_batch_block(B, S)
    assert B % Bt == 0

    # TODO(synk): these (S,B,E)<->(B,S,E) transposes are one extra HBM pass each;
    # keep activations batch-major upstream at production (ViT) scale.
    to_bse = lambda t, dt: jnp.transpose(t, (1, 0, 2)).astype(dt)
    rb = to_bse(residual, jnp.float32)

    act_spec = pl.BlockSpec((Bt, S, E), lambda i: (i, 0, 0))
    w_qkv_spec = pl.BlockSpec((E, 3 * E), lambda i: (0, 0))
    w_o_spec = pl.BlockSpec((E, E), lambda i: (0, 0))
    b_qkv_spec = pl.BlockSpec((1, 3 * E), lambda i: (0, 0))
    b_o_spec = pl.BlockSpec((1, E), lambda i: (0, 0))
    common = dict(
        out_shape=jax.ShapeDtypeStruct((B, S, E), jnp.float32),
        compiler_params=pltpu.CompilerParams(
            dimension_semantics=("parallel",),        # batch axis -> v7x TC-shardable
            vmem_limit_bytes=32 * 1024 * 1024,        # safe on v5e/v6e/v7x (see header)
        ),
    )

    if self_attn:
        xb = to_bse(query, jnp.bfloat16)
        out = pl.pallas_call(
            functools.partial(mha_self_kernel, num_heads=H),
            grid_spec=pltpu.PrefetchScalarGridSpec(
                num_scalar_prefetch=0, grid=(B // Bt,),
                in_specs=[act_spec, act_spec,
                          w_qkv_spec, w_o_spec, b_qkv_spec, b_o_spec],
                out_specs=act_spec),
            **common,
        )(xb, rb, params["wqkv"], params["wo"], params["bqkv"], params["bo"])
    else:
        Sk = key.shape[0]
        qb = to_bse(query, jnp.bfloat16)
        kb = to_bse(key, jnp.bfloat16)
        vb = to_bse(value, jnp.bfloat16)
        kv_spec = pl.BlockSpec((Bt, Sk, E), lambda i: (i, 0, 0))
        out = pl.pallas_call(
            functools.partial(mha_cross_kernel, num_heads=H),
            grid_spec=pltpu.PrefetchScalarGridSpec(
                num_scalar_prefetch=0, grid=(B // Bt,),
                in_specs=[act_spec, kv_spec, kv_spec, act_spec,
                          w_qkv_spec, w_o_spec, b_qkv_spec, b_o_spec],
                out_specs=act_spec),
            **common,
        )(qb, kb, vb, rb, params["wqkv"], params["wo"], params["bqkv"], params["bo"])

    return jnp.transpose(out, (1, 0, 2))              # back to (num_query, bs, embed_dims)


# ------------------------------- parameters ---------------------------------- #
def init_params(key, embed_dims, num_heads):
    """Raw f32 module parameters. Weights are stored pre-transposed (x @ W);
    a PyTorch checkpoint maps in_proj_weight (3E, E) -> row-split + transpose,
    out_proj.weight (E, E) -> transpose."""
    assert embed_dims % num_heads == 0
    ks = jax.random.split(key, 8)
    std = 1.0 / math.sqrt(embed_dims)
    w = lambda k: jax.random.normal(k, (embed_dims, embed_dims), jnp.float32) * std
    b = lambda k: jax.random.normal(k, (1, embed_dims), jnp.float32) * 0.5
    return dict(num_heads=num_heads,
                wq=w(ks[0]), wk=w(ks[1]), wv=w(ks[2]), wo=w(ks[3]),
                bq=b(ks[4]), bk=b(ks[5]), bv=b(ks[6]), bo=b(ks[7]))


def prepare_kernel_params(raw):
    """One-time transform to kernel-ready form: pack Wq/Wk/Wv -> (E, 3E) bf16 and
    bq/bk/bv -> (1, 3E) f32, with 1/sqrt(head_dim) folded into the Q columns/bias."""
    E = raw["wq"].shape[0]
    H = raw["num_heads"]
    scale = 1.0 / math.sqrt(E // H)
    wqkv = jnp.concatenate([raw["wq"] * scale, raw["wk"], raw["wv"]],
                           axis=1).astype(jnp.bfloat16)
    bqkv = jnp.concatenate([raw["bq"] * scale, raw["bk"], raw["bv"]],
                           axis=1).astype(jnp.float32)
    return dict(num_heads=H, wqkv=wqkv, bqkv=bqkv,
                wo=raw["wo"].astype(jnp.bfloat16),
                bo=raw["bo"].astype(jnp.float32))


# --------------------------- pure-JAX references ------------------------------ #
def mha_reference(x, raw, *, mirror_kernel_precision=False):
    """Self-attention reference from the raw f32 parameters. With
    mirror_kernel_precision=True it mirrors the kernel's bf16-operand /
    f32-accumulation matmuls; otherwise it is the plain f32 module math."""
    S, B, E = x.shape
    H = raw["num_heads"]
    D = E // H
    scale = 1.0 / math.sqrt(D)
    cast = (lambda a: a.astype(jnp.bfloat16)) if mirror_kernel_precision else (lambda a: a)
    xb = jnp.transpose(x, (1, 0, 2))                   # (B, S, E)

    def proj(w, b):
        return jnp.dot(cast(xb), cast(w), preferred_element_type=jnp.float32) + b

    Q = proj(raw["wq"], raw["bq"]) * scale             # torch scales q (incl. bias)
    K = proj(raw["wk"], raw["bk"])
    V = proj(raw["wv"], raw["bv"])
    split = lambda t: t.reshape(B, S, H, D).transpose(0, 2, 1, 3)
    Qh, Kh, Vh = split(Q), split(K), split(V)
    s = jnp.einsum("bhqd,bhkd->bhqk", cast(Qh), cast(Kh),
                   preferred_element_type=jnp.float32)
    p = jax.nn.softmax(s, axis=-1)
    ctx = jnp.einsum("bhqk,bhkd->bhqd", cast(p), cast(Vh),
                     preferred_element_type=jnp.float32)
    ctx = ctx.transpose(0, 2, 1, 3).reshape(B, S, E)
    out = jnp.dot(cast(ctx), cast(raw["wo"]),
                  preferred_element_type=jnp.float32) + raw["bo"]
    return jnp.transpose(xb + out, (1, 0, 2))


if __name__ == "__main__":
    # Small, lane-dense shapes: num_query=16, bs=2, embed_dims=256, heads=2 (head_dim=128).
    NUM_QUERY, BATCH, EMBED_DIMS, NUM_HEADS = 16, 2, 256, 2

    root = jax.random.PRNGKey(0)
    kx, kp = jax.random.split(root)
    x = jax.random.normal(kx, (NUM_QUERY, BATCH, EMBED_DIMS), jnp.float32)
    raw = init_params(kp, EMBED_DIMS, NUM_HEADS)
    params = prepare_kernel_params(raw)

    out = jax.block_until_ready(multihead_attention(x, params))
    assert out.shape == (NUM_QUERY, BATCH, EMBED_DIMS)
    assert bool(jnp.all(jnp.isfinite(out)))

    # Tight check vs. a reference mirroring the kernel's mixed precision, plus a
    # looser check vs. the plain-f32 module math (bf16 operands are deliberate).
    ref_mix = jax.block_until_ready(mha_reference(x, raw, mirror_kernel_precision=True))
    ref_f32 = jax.block_until_ready(mha_reference(x, raw, mirror_kernel_precision=False))
    err_mix = float(jnp.max(jnp.abs(out - ref_mix)))
    err_f32 = float(jnp.max(jnp.abs(out - ref_f32)))
    assert err_mix < 5e-2, f"mixed-precision reference max |err| = {err_mix}"
    assert err_f32 < 2.5e-1, f"f32 reference max |err| = {err_f32}"
    print("KERNEL_OK")
</pallas_src>

<mosaic_0001>
module attributes {stable_mosaic.version = 11 : i64} {
  func.func @mha_self_kernel(%arg0: i32, %arg1: memref<1x16x256xbf16, #tpu.memory_space<vmem>>, %arg2: memref<1x16x256xf32, #tpu.memory_space<vmem>>, %arg3: memref<256x768xbf16, #tpu.memory_space<vmem>>, %arg4: memref<256x256xbf16, #tpu.memory_space<vmem>>, %arg5: memref<1x768xf32, #tpu.memory_space<vmem>>, %arg6: memref<1x256xf32, #tpu.memory_space<vmem>>, %arg7: memref<1x16x256xf32, #tpu.memory_space<vmem>>) attributes {dimension_semantics = [#tpu.dimension_semantics<parallel>], iteration_bounds = array<i64: 2>, scalar_prefetch = 0 : i64, scratch_operands = 0 : i64, tpu.core_type = #tpu.core_type<tc>, window_params = [{transform_indices = @transform_0, window_bounds = array<i64: 1, 16, 256>}, {transform_indices = @transform_1, window_bounds = array<i64: 1, 16, 256>}, {pipeline_mode = #tpu.pipeline_mode<synchronous>, transform_indices = @transform_2, window_bounds = array<i64: 256, 768>}, {pipeline_mode = #tpu.pipeline_mode<synchronous>, transform_indices = @transform_3, window_bounds = array<i64: 256, 256>}, {pipeline_mode = #tpu.pipeline_mode<synchronous>, transform_indices = @transform_4, window_bounds = array<i64: 1, 768>}, {pipeline_mode = #tpu.pipeline_mode<synchronous>, transform_indices = @transform_5, window_bounds = array<i64: 1, 256>}, {transform_indices = @transform_6, window_bounds = array<i64: 1, 16, 256>}]} {
    %c0 = arith.constant 0 : index
    %c0_0 = arith.constant 0 : index
    %c0_1 = arith.constant 0 : index
    %0 = vector.load %arg1[%c0, %c0_0, %c0_1] : memref<1x16x256xbf16, #tpu.memory_space<vmem>>, vector<1x16x256xbf16>
    %1 = vector.shape_cast %0 : vector<1x16x256xbf16> to vector<16x256xbf16>
    %c0_2 = arith.constant 0 : index
    %c0_3 = arith.constant 0 : index
    %2 = vector.load %arg3[%c0_2, %c0_3] : memref<256x768xbf16, #tpu.memory_space<vmem>>, vector<256x768xbf16>
    %cst = arith.constant dense<0.000000e+00> : vector<16x768xf32>
    %3 = tpu.matmul %1, %2, %cst {dimension_numbers = #tpu.dot_dimension_numbers<[1], [0], [0], [1], [0, 0, 1, 1], [], []>} : vector<16x256xbf16>, vector<256x768xbf16>, vector<16x768xf32> -> vector<16x768xf32>
    %c0_4 = arith.constant 0 : index
    %c0_5 = arith.constant 0 : index
    %4 = vector.load %arg5[%c0_4, %c0_5] : memref<1x768xf32, #tpu.memory_space<vmem>>, vector<1x768xf32>
    %5 = vector.broadcast %4 : vector<1x768xf32> to vector<16x768xf32>
    %6 = arith.addf %3, %5 : vector<16x768xf32>
    %7 = vector.extract_strided_slice %6 {offsets = [0, 0], sizes = [16, 256], strides = [1, 1]} : vector<16x768xf32> to vector<16x256xf32>
    %8 = vector.extract_strided_slice %6 {offsets = [0, 256], sizes = [16, 256], strides = [1, 1]} : vector<16x768xf32> to vector<16x256xf32>
    %9 = vector.extract_strided_slice %6 {offsets = [0, 512], sizes = [16, 256], strides = [1, 1]} : vector<16x768xf32> to vector<16x256xf32>
    %cst_6 = arith.constant 0.000000e+00 : f32
    %10 = vector.broadcast %cst_6 : f32 to vector<16x256xf32>
    %11 = vector.extract_strided_slice %7 {offsets = [0, 0], sizes = [16, 128], strides = [1, 1]} : vector<16x256xf32> to vector<16x128xf32>
    %12 = arith.truncf %11 : vector<16x128xf32> to vector<16x128xbf16>
    %13 = vector.extract_strided_slice %8 {offsets = [0, 0], sizes = [16, 128], strides = [1, 1]} : vector<16x256xf32> to vector<16x128xf32>
    %14 = arith.truncf %13 : vector<16x128xf32> to vector<16x128xbf16>
    %15 = vector.extract_strided_slice %9 {offsets = [0, 0], sizes = [16, 128], strides = [1, 1]} : vector<16x256xf32> to vector<16x128xf32>
    %16 = arith.truncf %15 : vector<16x128xf32> to vector<16x128xbf16>
    %cst_7 = arith.constant dense<0.000000e+00> : vector<16x16xf32>
    %17 = tpu.matmul %12, %14, %cst_7 {dimension_numbers = #tpu.dot_dimension_numbers<[1], [1], [0], [0], [0, 0, 1, 0], [], []>} : vector<16x128xbf16>, vector<16x128xbf16>, vector<16x16xf32> -> vector<16x16xf32>
    %cst_8 = arith.constant dense<0xFF800000> : vector<16xf32>
    %18 = vector.multi_reduction <maximumf>, %17, %cst_8 [1] : vector<16x16xf32> to vector<16xf32>
    %19 = vector.shape_cast %18 : vector<16xf32> to vector<16x1xf32>
    %20 = vector.broadcast %19 : vector<16x1xf32> to vector<16x16xf32>
    %21 = arith.subf %17, %20 : vector<16x16xf32>
    %22 = math.exp %21 : vector<16x16xf32>
    %cst_9 = arith.constant dense<0.000000e+00> : vector<16xf32>
    %23 = vector.multi_reduction <add>, %22, %cst_9 [1] : vector<16x16xf32> to vector<16xf32>
    %24 = vector.shape_cast %23 : vector<16xf32> to vector<16x1xf32>
    %25 = arith.truncf %22 : vector<16x16xf32> to vector<16x16xbf16>
    %cst_10 = arith.constant dense<0.000000e+00> : vector<16x128xf32>
    %26 = tpu.matmul %25, %16, %cst_10 {dimension_numbers = #tpu.dot_dimension_numbers<[1], [0], [0], [1], [0, 0, 1, 1], [], []>} : vector<16x16xbf16>, vector<16x128xbf16>, vector<16x128xf32> -> vector<16x128xf32>
    %27 = tpu.reciprocal %24 {approx = true} : vector<16x1xf32> -> vector<16x1xf32>
    %28 = vector.broadcast %27 : vector<16x1xf32> to vector<16x128xf32>
    %29 = arith.mulf %26, %28 : vector<16x128xf32>
    %30 = arith.truncf %29 : vector<16x128xf32> to vector<16x128xbf16>
    %c0_11 = arith.constant 0 : index
    %c0_12 = arith.constant 0 : index
    %31 = vector.load %arg4[%c0_11, %c0_12] : memref<256x256xbf16, #tpu.memory_space<vmem>>, vector<128x256xbf16>
    %cst_13 = arith.constant dense<0.000000e+00> : vector<16x256xf32>
    %32 = tpu.matmul %30, %31, %cst_13 {dimension_numbers = #tpu.dot_dimension_numbers<[1], [0], [0], [1], [0, 0, 1, 1], [], []>} : vector<16x128xbf16>, vector<128x256xbf16>, vector<16x256xf32> -> vector<16x256xf32>
    %33 = arith.addf %10, %32 : vector<16x256xf32>
    %34 = vector.extract_strided_slice %7 {offsets = [0, 128], sizes = [16, 128], strides = [1, 1]} : vector<16x256xf32> to vector<16x128xf32>
    %35 = arith.truncf %34 : vector<16x128xf32> to vector<16x128xbf16>
    %36 = vector.extract_strided_slice %8 {offsets = [0, 128], sizes = [16, 128], strides = [1, 1]} : vector<16x256xf32> to vector<16x128xf32>
    %37 = arith.truncf %36 : vector<16x128xf32> to vector<16x128xbf16>
    %38 = vector.extract_strided_slice %9 {offsets = [0, 128], sizes = [16, 128], strides = [1, 1]} : vector<16x256xf32> to vector<16x128xf32>
    %39 = arith.truncf %38 : vector<16x128xf32> to vector<16x128xbf16>
    %cst_14 = arith.constant dense<0.000000e+00> : vector<16x16xf32>
    %40 = tpu.matmul %35, %37, %cst_14 {dimension_numbers = #tpu.dot_dimension_numbers<[1], [1], [0], [0], [0, 0, 1, 0], [], []>} : vector<16x128xbf16>, vector<16x128xbf16>, vector<16x16xf32> -> vector<16x16xf32>
    %cst_15 = arith.constant dense<0xFF800000> : vector<16xf32>
    %41 = vector.multi_reduction <maximumf>, %40, %cst_15 [1] : vector<16x16xf32> to vector<16xf32>
    %42 = vector.shape_cast %41 : vector<16xf32> to vector<16x1xf32>
    %43 = vector.broadcast %42 : vector<16x1xf32> to vector<16x16xf32>
    %44 = arith.subf %40, %43 : vector<16x16xf32>
    %45 = math.exp %44 : vector<16x16xf32>
    %cst_16 = arith.constant dense<0.000000e+00> : vector<16xf32>
    %46 = vector.multi_reduction <add>, %45, %cst_16 [1] : vector<16x16xf32> to vector<16xf32>
    %47 = vector.shape_cast %46 : vector<16xf32> to vector<16x1xf32>
    %48 = arith.truncf %45 : vector<16x16xf32> to vector<16x16xbf16>
    %cst_17 = arith.constant dense<0.000000e+00> : vector<16x128xf32>
    %49 = tpu.matmul %48, %39, %cst_17 {dimension_numbers = #tpu.dot_dimension_numbers<[1], [0], [0], [1], [0, 0, 1, 1], [], []>} : vector<16x16xbf16>, vector<16x128xbf16>, vector<16x128xf32> -> vector<16x128xf32>
    %50 = tpu.reciprocal %47 {approx = true} : vector<16x1xf32> -> vector<16x1xf32>
    %51 = vector.broadcast %50 : vector<16x1xf32> to vector<16x128xf32>
    %52 = arith.mulf %49, %51 : vector<16x128xf32>
    %53 = arith.truncf %52 : vector<16x128xf32> to vector<16x128xbf16>
    %c128 = arith.constant 128 : index
    %c0_18 = arith.constant 0 : index
    %54 = vector.load %arg4[%c128, %c0_18] : memref<256x256xbf16, #tpu.memory_space<vmem>>, vector<128x256xbf16>
    %cst_19 = arith.constant dense<0.000000e+00> : vector<16x256xf32>
    %55 = tpu.matmul %53, %54, %cst_19 {dimension_numbers = #tpu.dot_dimension_numbers<[1], [0], [0], [1], [0, 0, 1, 1], [], []>} : vector<16x128xbf16>, vector<128x256xbf16>, vector<16x256xf32> -> vector<16x256xf32>
    %56 = arith.addf %33, %55 : vector<16x256xf32>
    %c0_20 = arith.constant 0 : index
    %c0_21 = arith.constant 0 : index
    %c0_22 = arith.constant 0 : index
    %57 = vector.load %arg2[%c0_20, %c0_21, %c0_22] : memref<1x16x256xf32, #tpu.memory_space<vmem>>, vector<1x16x256xf32>
    %58 = vector.shape_cast %57 : vector<1x16x256xf32> to vector<16x256xf32>
    %59 = arith.addf %58, %56 : vector<16x256xf32>
    %c0_23 = arith.constant 0 : index
    %c0_24 = arith.constant 0 : index
    %60 = vector.load %arg6[%c0_23, %c0_24] : memref<1x256xf32, #tpu.memory_space<vmem>>, vector<1x256xf32>
    %61 = vector.broadcast %60 : vector<1x256xf32> to vector<16x256xf32>
    %62 = arith.addf %59, %61 : vector<16x256xf32>
    %c0_25 = arith.constant 0 : index
    %c0_26 = arith.constant 0 : index
    %c0_27 = arith.constant 0 : index
    %63 = vector.load %arg7[%c0_25, %c0_26, %c0_27] : memref<1x16x256xf32, #tpu.memory_space<vmem>>, vector<1x16x256xf32>
    %64 = vector.shape_cast %63 : vector<1x16x256xf32> to vector<16x256xf32>
    %65 = vector.shape_cast %62 : vector<16x256xf32> to vector<1x16x256xf32>
    tpu.vector_store %arg7[%c0_25, %c0_26, %c0_27], %65 {strides = array<i32>} : memref<1x16x256xf32, #tpu.memory_space<vmem>>, vector<1x16x256xf32>,
    return
  }
  func.func @transform_0(%arg0: i32) -> (i32, i32, i32) {
    %c0_i32 = arith.constant 0 : i32
    %c0_i32_0 = arith.constant 0 : i32
    %c0_i32_1 = arith.constant 0 : i32
    return %arg0, %c0_i32, %c0_i32_0 : i32, i32, i32
  }
  func.func @transform_1(%arg0: i32) -> (i32, i32, i32) {
    %c0_i32 = arith.constant 0 : i32
    %c0_i32_0 = arith.constant 0 : i32
    %c0_i32_1 = arith.constant 0 : i32
    return %arg0, %c0_i32, %c0_i32_0 : i32, i32, i32
  }
  func.func @transform_2(%arg0: i32) -> (i32, i32) {
    %c0_i32 = arith.constant 0 : i32
    %c0_i32_0 = arith.constant 0 : i32
    %c0_i32_1 = arith.constant 0 : i32
    return %c0_i32, %c0_i32_0 : i32, i32
  }
  func.func @transform_3(%arg0: i32) -> (i32, i32) {
    %c0_i32 = arith.constant 0 : i32
    %c0_i32_0 = arith.constant 0 : i32
    %c0_i32_1 = arith.constant 0 : i32
    return %c0_i32, %c0_i32_0 : i32, i32
  }
  func.func @transform_4(%arg0: i32) -> (i32, i32) {
    %c0_i32 = arith.constant 0 : i32
    %c0_i32_0 = arith.constant 0 : i32
    %c0_i32_1 = arith.constant 0 : i32
    return %c0_i32, %c0_i32_0 : i32, i32
  }
  func.func @transform_5(%arg0: i32) -> (i32, i32) {
    %c0_i32 = arith.constant 0 : i32
    %c0_i32_0 = arith.constant 0 : i32
    %c0_i32_1 = arith.constant 0 : i32
    return %c0_i32, %c0_i32_0 : i32, i32
  }
  func.func @transform_6(%arg0: i32) -> (i32, i32, i32) {
    %c0_i32 = arith.constant 0 : i32
    %c0_i32_0 = arith.constant 0 : i32
    %c0_i32_1 = arith.constant 0 : i32
    return %arg0, %c0_i32, %c0_i32_0 : i32, i32, i32
  }
}

</mosaic_0001>

<llo_original>
// kernel: tpu_custom_call.1
$region0: #{tpu_custom_call.1}
  #allocation0 [shape = 'u32[]', space=smem, size = 0x4, offset = 0x4, fixed_abs, tag = 'smem constant byte address 0x4 - core index']
  #allocation1 [shape = 'u32[144,128]{1,0:T(1,128)}', space=vmem, size = 0x12000, scoped, tag = 'internal scratch']
  %s0 = inlined_call_operand.hbm [shape: bf16[2,16,256], index: 0, kind: input, shape index: {}]
  %s1 = inlined_call_operand.hbm [shape: f32[2,16,256], index: 1, kind: input, shape index: {}]
  %s2 = inlined_call_operand.hbm [shape: bf16[256,768], index: 2, kind: input, shape index: {}]
  %s3 = inlined_call_operand.hbm [shape: bf16[256,256], index: 3, kind: input, shape index: {}]
  %s4 = inlined_call_operand.vmem [shape: f32[1,768], index: 4, kind: input, shape index: {}]
  %s5 = inlined_call_operand.vmem [shape: f32[1,256], index: 5, kind: input, shape index: {}]
  %s6 = inlined_call_operand.hbm [shape: f32[2,16,256], index: 6, kind: output, shape index: {}]
  %s7 = sld [smem:[#allocation0]]
  $region73: #{tpu_custom_call.1} parent=0
    _
  %s9 = ssub.s32 1, %s7
  %s10 = scalar_select 0, %s9, %s7
  $region1: #{tpu_custom_call.1} parent=0
    #allocation2 [shape = 'u8[16384]{0}', space=vmem, size = 0x4000, scoped, tag = 'input window, operand 0']
    #allocation3 [shape = 's32[2]{0}', space=sflag, size = 0x8, scoped, tag = 'scoped memory for tpu_custom_call.1']
    #allocation4 [shape = 's32[2]{0}', space=sflag, size = 0x8, scoped, tag = 'scoped memory for tpu_custom_call.1']
    #allocation5 [shape = 'u8[32768]{0}', space=vmem, size = 0x8000, scoped, tag = 'input window, operand 1']
    #allocation6 [shape = 's32[2]{0}', space=sflag, size = 0x8, scoped, tag = 'scoped memory for tpu_custom_call.1']
    #allocation7 [shape = 'u8[393216]{0}', space=vmem, size = 0x60000, scoped, tag = 'input window, operand 2, single buffered']
    #allocation8 [shape = 'u8[131072]{0}', space=vmem, size = 0x20000, scoped, tag = 'input window, operand 3, single buffered']
    #allocation9 [shape = 's32[1]{0}', space=sflag, size = 0x4, scoped, tag = 'scoped memory for tpu_custom_call.1']
    #allocation10 [shape = 'u8[32768]{0}', space=vmem, size = 0x8000, scoped, tag = 'output window, operand 0']
    %11 = vsyncpa [#allocation3], 0
    %s12 = scalar_lea.sflag [#allocation3], 1
    %13 = vsyncpa %s12, 0
    %14 = vsyncpa [#allocation6], 0
    %s15 = scalar_lea.sflag [#allocation6], 1
    %16 = vsyncpa %s15, 0
    %17 = vsyncpa [#allocation9], 0
    %18 = vsyncpa [#allocation4], 0
    %s19 = scalar_lea.sflag [#allocation4], 1
    %20 = vsyncpa %s19, 0
    loop: start=0, step=1, limit=4
    $region2: #{tpu_custom_call.1} parent=1 // loop_pre_header
      _
    $region3: #{tpu_custom_call.1} parent=1 // loop_header
      %s22 = sphi 0, %s26
      %p23 = scmp.ge.s32.totalorder %s22, 4
      %s32 = sphi 0, %s34
      %s35 = sphi 0, %s32
      %s36 = sphi 0, %s35
      %s52 = sphi 0, %s36
      %s58 = sphi 0, %s60
      %s61 = sphi 0, %s58
      %s62 = sphi 0, %s61
      %s78 = sphi 0, %s62
      %s82 = sphi 0, %s82
      %s84 = sphi 0, %s82
      %s85 = sphi 0, %s84
      %s99 = sphi 0, %s85
      %s103 = sphi 0, %s103
      %s105 = sphi 0, %s103
      %s106 = sphi 0, %s105
      %s120 = sphi 0, %s106
      %s124 = sphi 0, %s124
      %s126 = sphi 0, %s124
      %s127 = sphi 0, %s126
      %s141 = sphi 0, %s127
      %s145 = sphi 0, %s145
      %s147 = sphi 0, %s145
      %s148 = sphi 0, %s147
      %s162 = sphi 0, %s148
      %s168 = sphi 0, %s170
      %s171 = sphi 0, %s168
      %s172 = sphi 0, %s171
      %s188 = sphi 0, %s172
    $region4: #{tpu_custom_call.1} parent=1 // loop_header_branch
      %25 = sbr.rel (%p23) target = $region8
    $region5: #{tpu_custom_call.1} parent=1 // loop_body
      %s27 = ssub.s32 %s22, 1
      %s28 = ssub.s32 %s22, 2
      %s29 = sadd.s32 %s22, 1
      %s30 = ssub.s32 %s22, %s29
      %p31 = scmp.eq.s32.totalorder %s30, 0
      %s33 = sadd.s32 %s32, 1
      %s34 = scalar_select %p31, %s32, %s33
      %p37 = pneg %p31
      %p38 = scmp.eq.s32.totalorder %s22, 1
      %p39 = por %p37, %p38
      %p40 = scmp.ne.s32.totalorder %s32, %s35
      %p41 = scmp.eq.s32.totalorder %s22, 0
      %p42 = por %p40, %p41
      %p43 = scmp.ne.s32.totalorder %s32, %s35
      %p44 = scmp.eq.s32.totalorder %s27, 1
      %p45 = por %p43, %p44
      %p46 = scmp.ne.s32.totalorder %s35, %s36
      %p47 = scmp.eq.s32.totalorder %s27, 0
      %p48 = por %p46, %p47
      %p49 = scmp.ne.s32.totalorder %s35, %s36
      %p50 = scmp.eq.s32.totalorder %s28, 1
      %p51 = por %p49, %p50
      %p53 = scmp.ne.s32.totalorder %s36, %s52
      %p54 = scmp.eq.s32.totalorder %s28, 0
      %p55 = por %p53, %p54
      %s56 = ssub.s32 %s22, %s29
      %p57 = scmp.eq.s32.totalorder %s56, 0
      %s59 = sadd.s32 %s58, 1
      %s60 = scalar_select %p57, %s58, %s59
      %p63 = pneg %p57
      %p64 = scmp.eq.s32.totalorder %s22, 1
      %p65 = por %p63, %p64
      %p66 = scmp.ne.s32.totalorder %s58, %s61
      %p67 = scmp.eq.s32.totalorder %s22, 0
      %p68 = por %p66, %p67
      %p69 = scmp.ne.s32.totalorder %s58, %s61
      %p70 = scmp.eq.s32.totalorder %s27, 1
      %p71 = por %p69, %p70
      %p72 = scmp.ne.s32.totalorder %s61, %s62
      %p73 = scmp.eq.s32.totalorder %s27, 0
      %p74 = por %p72, %p73
      %p75 = scmp.ne.s32.totalorder %s61, %s62
      %p76 = scmp.eq.s32.totalorder %s28, 1
      %p77 = por %p75, %p76
      %p79 = scmp.ne.s32.totalorder %s62, %s78
      %p80 = scmp.eq.s32.totalorder %s28, 0
      %p81 = por %p79, %p80
      %s83 = sadd.s32 %s82, 1
      %p86 = scmp.eq.s32.totalorder %s22, 1
      %p87 = scmp.ne.s32.totalorder %s82, %s84
      %p88 = scmp.eq.s32.totalorder %s22, 0
      %p89 = por %p87, %p88
      %p90 = scmp.ne.s32.totalorder %s82, %s84
      %p91 = scmp.eq.s32.totalorder %s27, 1
      %p92 = por %p90, %p91
      %p93 = scmp.ne.s32.totalorder %s84, %s85
      %p94 = scmp.eq.s32.totalorder %s27, 0
      %p95 = por %p93, %p94
      %p96 = scmp.ne.s32.totalorder %s84, %s85
      %p97 = scmp.eq.s32.totalorder %s28, 1
      %p98 = por %p96, %p97
      %p100 = scmp.ne.s32.totalorder %s85, %s99
      %p101 = scmp.eq.s32.totalorder %s28, 0
      %p102 = por %p100, %p101
      %s104 = sadd.s32 %s103, 1
      %p107 = scmp.eq.s32.totalorder %s22, 1
      %p108 = scmp.ne.s32.totalorder %s103, %s105
      %p109 = scmp.eq.s32.totalorder %s22, 0
      %p110 = por %p108, %p109
      %p111 = scmp.ne.s32.totalorder %s103, %s105
      %p112 = scmp.eq.s32.totalorder %s27, 1
      %p113 = por %p111, %p112
      %p114 = scmp.ne.s32.totalorder %s105, %s106
      %p115 = scmp.eq.s32.totalorder %s27, 0
      %p116 = por %p114, %p115
      %p117 = scmp.ne.s32.totalorder %s105, %s106
      %p118 = scmp.eq.s32.totalorder %s28, 1
      %p119 = por %p117, %p118
      %p121 = scmp.ne.s32.totalorder %s106, %s120
      %p122 = scmp.eq.s32.totalorder %s28, 0
      %p123 = por %p121, %p122
      %s125 = sadd.s32 %s124, 1
      %p128 = scmp.eq.s32.totalorder %s22, 1
      %p129 = scmp.ne.s32.totalorder %s124, %s126
      %p130 = scmp.eq.s32.totalorder %s22, 0
      %p131 = por %p129, %p130
      %p132 = scmp.ne.s32.totalorder %s124, %s126
      %p133 = scmp.eq.s32.totalorder %s27, 1
      %p134 = por %p132, %p133
      %p135 = scmp.ne.s32.totalorder %s126, %s127
      %p136 = scmp.eq.s32.totalorder %s27, 0
      %p137 = por %p135, %p136
      %p138 = scmp.ne.s32.totalorder %s126, %s127
      %p139 = scmp.eq.s32.totalorder %s28, 1
      %p140 = por %p138, %p139
      %p142 = scmp.ne.s32.totalorder %s127, %s141
      %p143 = scmp.eq.s32.totalorder %s28, 0
      %p144 = por %p142, %p143
      %s146 = sadd.s32 %s145, 1
      %p149 = scmp.eq.s32.totalorder %s22, 1
      %p150 = scmp.ne.s32.totalorder %s145, %s147
      %p151 = scmp.eq.s32.totalorder %s22, 0
      %p152 = por %p150, %p151
      %p153 = scmp.ne.s32.totalorder %s145, %s147
      %p154 = scmp.eq.s32.totalorder %s27, 1
      %p155 = por %p153, %p154
      %p156 = scmp.ne.s32.totalorder %s147, %s148
      %p157 = scmp.eq.s32.totalorder %s27, 0
      %p158 = por %p156, %p157
      %p159 = scmp.ne.s32.totalorder %s147, %s148
      %p160 = scmp.eq.s32.totalorder %s28, 1
      %p161 = por %p159, %p160
      %p163 = scmp.ne.s32.totalorder %s148, %s162
      %p164 = scmp.eq.s32.totalorder %s28, 0
      %p165 = por %p163, %p164
      %s166 = ssub.s32 %s22, %s29
      %p167 = scmp.eq.s32.totalorder %s166, 0
      %s169 = sadd.s32 %s168, 1
      %s170 = scalar_select %p167, %s168, %s169
      %p173 = pneg %p167
      %p174 = scmp.eq.s32.totalorder %s22, 1
      %p175 = por %p173, %p174
      %p176 = scmp.ne.s32.totalorder %s168, %s171
      %p177 = scmp.eq.s32.totalorder %s22, 0
      %p178 = por %p176, %p177
      %p179 = scmp.ne.s32.totalorder %s168, %s171
      %p180 = scmp.eq.s32.totalorder %s27, 1
      %p181 = por %p179, %p180
      %p182 = scmp.ne.s32.totalorder %s171, %s172
      %p183 = scmp.eq.s32.totalorder %s27, 0
      %p184 = por %p182, %p183
      %p185 = scmp.ne.s32.totalorder %s171, %s172
      %p186 = scmp.eq.s32.totalorder %s28, 1
      %p187 = por %p185, %p186
      %p189 = scmp.ne.s32.totalorder %s172, %s188
      %p190 = scmp.eq.s32.totalorder %s28, 0
      %p191 = por %p189, %p190
      %p192 = scmp.le.s32.totalorder 1, %s22
      %p193 = scmp.lt.s32.totalorder %s22, 3
      %p194 = pnand %p192, %p193
      %p195 = pneg %p194
      // Predicated region
      $region9: #{tpu_custom_call.1} parent=5 // pred_check
        _
      $region10: #{tpu_custom_call.1} parent=5 // pred_check_branch
        %197 = sbr.rel (%p194) target = $region12
      $region11: #{tpu_custom_call.1} parent=5 // pred_region
        %s198 = ssub.s32 %s22, 1
        // Predicated region
        $region13: #{tpu_custom_call.1} parent=11 // pred_check
          %p199 = pneg %p95
        $region14: #{tpu_custom_call.1} parent=11 // pred_check_branch
          %201 = sbr.rel (%p199) target = $region16
        $region15: #{tpu_custom_call.1} parent=11 // pred_region
          %s203 = ssub.s32 12288, 12288
          %204 = vsyncadd [#allocation6], %s203
          %s205 = sshll.u32 [#allocation7], 4
          %s206 = int_to_ptr.vmem [resolvable:$true] %s205
          %211 = dma.hbm_to_vmem [thread:$0]  %s2, 12288, %s206, [#allocation6], 384, 384, 24
        $region16: #{tpu_custom_call.1} parent=11 // pred_fallthru
          _
        // Predicated region
        $region17: #{tpu_custom_call.1} parent=11 // pred_check
          %p212 = pneg %p116
        $region18: #{tpu_custom_call.1} parent=11 // pred_check_branch
          %214 = sbr.rel (%p212) target = $region20
        $region19: #{tpu_custom_call.1} parent=11 // pred_region
          %s216 = ssub.s32 4096, 4096
          %217 = vsyncadd [#allocation9], %s216
          %s218 = sshll.u32 [#allocation8], 4
          %s219 = int_to_ptr.vmem [resolvable:$true] %s218
          %224 = dma.hbm_to_vmem [thread:$0]  %s3, 4096, %s219, [#allocation9], 128, 128, 8
        $region20: #{tpu_custom_call.1} parent=11 // pred_fallthru
          _
        // Predicated region
        $region21: #{tpu_custom_call.1} parent=11 // pred_check
          %p225 = pneg %p137
        $region22: #{tpu_custom_call.1} parent=11 // pred_check_branch
          %227 = sbr.rel (%p225) target = $region24
        $region23: #{tpu_custom_call.1} parent=11 // pred_region
          _
        $region24: #{tpu_custom_call.1} parent=11 // pred_fallthru
          _
        // Predicated region
        $region25: #{tpu_custom_call.1} parent=11 // pred_check
          %p228 = pneg %p158
        $region26: #{tpu_custom_call.1} parent=11 // pred_check_branch
          %230 = sbr.rel (%p228) target = $region28
        $region27: #{tpu_custom_call.1} parent=11 // pred_region
          _
        $region28: #{tpu_custom_call.1} parent=11 // pred_fallthru
          _
      $region12: #{tpu_custom_call.1} parent=5 // pred_fallthru
        _
      %p231 = scmp.lt.s32.totalorder %s22, 2
      // Predicated region
      $region29: #{tpu_custom_call.1} parent=5 // pred_check
        %p232 = pneg %p231
      $region30: #{tpu_custom_call.1} parent=5 // pred_check_branch
        %234 = sbr.rel (%p232) target = $region32
      $region31: #{tpu_custom_call.1} parent=5 // pred_region
        // Predicated region
        $region33: #{tpu_custom_call.1} parent=31 // pred_check
          %p235 = pneg %p42
        $region34: #{tpu_custom_call.1} parent=31 // pred_check_branch
          %237 = sbr.rel (%p235) target = $region36
        $region35: #{tpu_custom_call.1} parent=31 // pred_region
          %s238 = sand.u32 %s32, 1
          %s239 = scalar_lea.sflag [#allocation3], %s238
          %s240 = sand.u32 %s32, 1
          %s241 = smul.addr %s240, 16
          %s242 = scalar_lea.vmem [#allocation2], %s241
          %s244 = ssub.s32 256, 256
          %245 = vsyncadd %s239, %s244
          %s246 = smul.addr %s22, 4
          %s247 = smul.addr %s246, 64
          %s248 = scalar_lea.hbm %s0, %s247
          %s249 = sshll.u32 %s242, 4
          %s250 = int_to_ptr.vmem [resolvable:$true] %s249
          %255 = dma.hbm_to_vmem [thread:$0]  %s248, 256, %s250, %s239, 128, 128, 8
        $region36: #{tpu_custom_call.1} parent=31 // pred_fallthru
          _
        // Predicated region
        $region37: #{tpu_custom_call.1} parent=31 // pred_check
          %p256 = pneg %p68
        $region38: #{tpu_custom_call.1} parent=31 // pred_check_branch
          %258 = sbr.rel (%p256) target = $region40
        $region39: #{tpu_custom_call.1} parent=31 // pred_region
          %s259 = sand.u32 %s22, 1
          %s260 = scalar_lea.sflag [#allocation6], %s259
          %s261 = sand.u32 %s58, 1
          %s262 = smul.addr %s261, 32
          %s263 = scalar_lea.vmem [#allocation5], %s262
          %s265 = ssub.s32 512, 512
          %266 = vsyncadd %s260, %s265
          %s267 = smul.addr %s22, 4
          %s268 = smul.addr %s267, 128
          %s269 = scalar_lea.hbm %s1, %s268
          %s270 = sshll.u32 %s263, 4
          %s271 = int_to_ptr.vmem [resolvable:$true] %s270
          %276 = dma.hbm_to_vmem [thread:$0]  %s269, 512, %s271, %s260, 256, 256, 16
        $region40: #{tpu_custom_call.1} parent=31 // pred_fallthru
          _
      $region32: #{tpu_custom_call.1} parent=5 // pred_fallthru
        _
      %p277 = scmp.le.s32.totalorder 1, %s22
      %p278 = scmp.lt.s32.totalorder %s22, 3
      %p279 = pnand %p277, %p278
      %p280 = pneg %p279
      // Predicated region
      $region41: #{tpu_custom_call.1} parent=5 // pred_check
        _
      $region42: #{tpu_custom_call.1} parent=5 // pred_check_branch
        %282 = sbr.rel (%p279) target = $region44
      $region43: #{tpu_custom_call.1} parent=5 // pred_region
        %s283 = ssub.s32 %s22, 1
        %s284 = sand.u32 %s35, 1
        %s285 = scalar_lea.sflag [#allocation3], %s284
        %s286 = sand.u32 %s35, 1
        %s287 = smul.addr %s286, 16
        %s288 = scalar_lea.vmem [#allocation2], %s287
        // Predicated region
        $region45: #{tpu_custom_call.1} parent=43 // pred_check
          %p289 = pneg %p48
        $region46: #{tpu_custom_call.1} parent=43 // pred_check_branch
          %291 = sbr.rel (%p289) target = $region48
        $region47: #{tpu_custom_call.1} parent=43 // pred_region
          %292 = dma.done %s285, 256
        $region48: #{tpu_custom_call.1} parent=43 // pred_fallthru
          _
        %s293 = sand.u32 %s27, 1
        %s294 = scalar_lea.sflag [#allocation6], %s293
        %s295 = sand.u32 %s61, 1
        %s296 = smul.addr %s295, 32
        %s297 = scalar_lea.vmem [#allocation5], %s296
        // Predicated region
        $region49: #{tpu_custom_call.1} parent=43 // pred_check
          %p298 = pneg %p74
        $region50: #{tpu_custom_call.1} parent=43 // pred_check_branch
          %300 = sbr.rel (%p298) target = $region52
        $region51: #{tpu_custom_call.1} parent=43 // pred_region
          %301 = dma.done %s294, 512
        $region52: #{tpu_custom_call.1} parent=43 // pred_fallthru
          _
        // Predicated region
        $region53: #{tpu_custom_call.1} parent=43 // pred_check
          %p302 = pneg %p95
        $region54: #{tpu_custom_call.1} parent=43 // pred_check_branch
          %304 = sbr.rel (%p302) target = $region56
        $region55: #{tpu_custom_call.1} parent=43 // pred_region
          %305 = dma.done [#allocation6], 12288
        $region56: #{tpu_custom_call.1} parent=43 // pred_fallthru
          _
        // Predicated region
        $region57: #{tpu_custom_call.1} parent=43 // pred_check
          %p306 = pneg %p116
        $region58: #{tpu_custom_call.1} parent=43 // pred_check_branch
          %308 = sbr.rel (%p306) target = $region60
        $region59: #{tpu_custom_call.1} parent=43 // pred_region
          %309 = dma.done [#allocation9], 4096
        $region60: #{tpu_custom_call.1} parent=43 // pred_fallthru
          _
        %s310 = sand.u32 %s35, 1
        %s311 = scalar_lea.sflag [#allocation3], %s310
        %s312 = sand.u32 %s35, 1
        %s313 = smul.addr %s312, 16
        %s314 = scalar_lea.vmem [#allocation2], %s313
        %p315 = pneg %p48
        %p316 = pneg %p45
        %s317 = sand.u32 %s27, 1
        %s318 = scalar_lea.sflag [#allocation6], %s317
        %s319 = sand.u32 %s61, 1
        %s320 = smul.addr %s319, 32
        %s321 = scalar_lea.vmem [#allocation5], %s320
        %p322 = pneg %p74
        %p323 = pneg %p71
        %p324 = pneg %p95
        %p325 = pneg %p92
        %p326 = pneg %p116
        %p327 = pneg %p113
        %p328 = pneg %p137
        %p329 = pneg %p134
        %p330 = pneg %p158
        %p331 = pneg %p155
        %p332 = pneg %p184
        %p333 = pneg %p181
        %s334 = sand.u32 %s171, 1
        %s335 = scalar_lea.sflag [#allocation4], %s334
        %s336 = sand.u32 %s171, 1
        %s337 = smul.addr %s336, 32
        %s338 = scalar_lea.vmem [#allocation10], %s337
        %v340 = vld [vmem:[%s288] sm:$0xff]
        %v341 = vld [vmem:[%s288 + $0x8] sm:$0xff]
        %v342 = vld [vmem:[#allocation7] sm:$0xff]
        %v343 = vld [vmem:[#allocation7 + $0x8] sm:$0xff]
        %v344 = vld [vmem:[#allocation7 + $0x10] sm:$0xff]
        %v345 = vld [vmem:[#allocation7 + $0x18] sm:$0xff]
        %v346 = vld [vmem:[#allocation7 + $0x20] sm:$0xff]
        %v347 = vld [vmem:[#allocation7 + $0x28] sm:$0xff]
        %v348 = vld [vmem:[#allocation7 + $0x30] sm:$0xff]
        %v349 = vld [vmem:[#allocation7 + $0x38] sm:$0xff]
        %v350 = vld [vmem:[#allocation7 + $0x40] sm:$0xff]
        %v351 = vld [vmem:[#allocation7 + $0x48] sm:$0xff]
        %v352 = vld [vmem:[#allocation7 + $0x50] sm:$0xff]
        %v353 = vld [vmem:[#allocation7 + $0x58] sm:$0xff]
        %v354 = vld [vmem:[#allocation7 + $0x60] sm:$0xff]
        %v355 = vld [vmem:[#allocation7 + $0x68] sm:$0xff]
        %v356 = vld [vmem:[#allocation7 + $0x70] sm:$0xff]
        %v357 = vld [vmem:[#allocation7 + $0x78] sm:$0xff]
        %v358 = vld [vmem:[#allocation7 + $0x80] sm:$0xff]
        %v359 = vld [vmem:[#allocation7 + $0x88] sm:$0xff]
        %v360 = vld [vmem:[#allocation7 + $0x90] sm:$0xff]
        %v361 = vld [vmem:[#allocation7 + $0x98] sm:$0xff]
        %v362 = vld [vmem:[#allocation7 + $0xa0] sm:$0xff]
        %v363 = vld [vmem:[#allocation7 + $0xa8] sm:$0xff]
        %v364 = vld [vmem:[#allocation7 + $0xb0] sm:$0xff]
        %v365 = vld [vmem:[#allocation7 + $0xb8] sm:$0xff]
        %v366 = vld [vmem:[#allocation7 + $0xc0] sm:$0xff]
        %v367 = vld [vmem:[#allocation7 + $0xc8] sm:$0xff]
        %v368 = vld [vmem:[#allocation7 + $0xd0] sm:$0xff]
        %v369 = vld [vmem:[#allocation7 + $0xd8] sm:$0xff]
        %v370 = vld [vmem:[#allocation7 + $0xe0] sm:$0xff]
        %v371 = vld [vmem:[#allocation7 + $0xe8] sm:$0xff]
        %v372 = vld [vmem:[#allocation7 + $0xf0] sm:$0xff]
        %v373 = vld [vmem:[#allocation7 + $0xf8] sm:$0xff]
        %v374 = vld [vmem:[#allocation7 + $0x100] sm:$0xff]
        %v375 = vld [vmem:[#allocation7 + $0x108] sm:$0xff]
        %v376 = vld [vmem:[#allocation7 + $0x110] sm:$0xff]
        %v377 = vld [vmem:[#allocation7 + $0x118] sm:$0xff]
        %v378 = vld [vmem:[#allocation7 + $0x120] sm:$0xff]
        %v379 = vld [vmem:[#allocation7 + $0x128] sm:$0xff]
        %v380 = vld [vmem:[#allocation7 + $0x130] sm:$0xff]
        %v381 = vld [vmem:[#allocation7 + $0x138] sm:$0xff]
        %v382 = vld [vmem:[#allocation7 + $0x140] sm:$0xff]
        %v383 = vld [vmem:[#allocation7 + $0x148] sm:$0xff]
        %v384 = vld [vmem:[#allocation7 + $0x150] sm:$0xff]
        %v385 = vld [vmem:[#allocation7 + $0x158] sm:$0xff]
        %v386 = vld [vmem:[#allocation7 + $0x160] sm:$0xff]
        %v387 = vld [vmem:[#allocation7 + $0x168] sm:$0xff]
        %v388 = vld [vmem:[#allocation7 + $0x170] sm:$0xff]
        %v389 = vld [vmem:[#allocation7 + $0x178] sm:$0xff]
        %v390 = vld [vmem:[#allocation7 + $0x180] sm:$0xff]
        %v391 = vld [vmem:[#allocation7 + $0x188] sm:$0xff]
        %v392 = vld [vmem:[#allocation7 + $0x190] sm:$0xff]
        %v393 = vld [vmem:[#allocation7 + $0x198] sm:$0xff]
        %v394 = vld [vmem:[#allocation7 + $0x1a0] sm:$0xff]
        %v395 = vld [vmem:[#allocation7 + $0x1a8] sm:$0xff]
        %v396 = vld [vmem:[#allocation7 + $0x1b0] sm:$0xff]
        %v397 = vld [vmem:[#allocation7 + $0x1b8] sm:$0xff]
        %v398 = vld [vmem:[#allocation7 + $0x1c0] sm:$0xff]
        %v399 = vld [vmem:[#allocation7 + $0x1c8] sm:$0xff]
        %v400 = vld [vmem:[#allocation7 + $0x1d0] sm:$0xff]
        %v401 = vld [vmem:[#allocation7 + $0x1d8] sm:$0xff]
        %v402 = vld [vmem:[#allocation7 + $0x1e0] sm:$0xff]
        %v403 = vld [vmem:[#allocation7 + $0x1e8] sm:$0xff]
        %v404 = vld [vmem:[#allocation7 + $0x1f0] sm:$0xff]
        %v405 = vld [vmem:[#allocation7 + $0x1f8] sm:$0xff]
        %v406 = vld [vmem:[#allocation7 + $0x200] sm:$0xff]
        %v407 = vld [vmem:[#allocation7 + $0x208] sm:$0xff]
        %v408 = vld [vmem:[#allocation7 + $0x210] sm:$0xff]
        %v409 = vld [vmem:[#allocation7 + $0x218] sm:$0xff]
        %v410 = vld [vmem:[#allocation7 + $0x220] sm:$0xff]
        %v411 = vld [vmem:[#allocation7 + $0x228] sm:$0xff]
        %v412 = vld [vmem:[#allocation7 + $0x230] sm:$0xff]
        %v413 = vld [vmem:[#allocation7 + $0x238] sm:$0xff]
        %v414 = vld [vmem:[#allocation7 + $0x240] sm:$0xff]
        %v415 = vld [vmem:[#allocation7 + $0x248] sm:$0xff]
        %v416 = vld [vmem:[#allocation7 + $0x250] sm:$0xff]
        %v417 = vld [vmem:[#allocation7 + $0x258] sm:$0xff]
        %v418 = vld [vmem:[#allocation7 + $0x260] sm:$0xff]
        %v419 = vld [vmem:[#allocation7 + $0x268] sm:$0xff]
        %v420 = vld [vmem:[#allocation7 + $0x270] sm:$0xff]
        %v421 = vld [vmem:[#allocation7 + $0x278] sm:$0xff]
        %v422 = vld [vmem:[#allocation7 + $0x280] sm:$0xff]
        %v423 = vld [vmem:[#allocation7 + $0x288] sm:$0xff]
        %v424 = vld [vmem:[#allocation7 + $0x290] sm:$0xff]
        %v425 = vld [vmem:[#allocation7 + $0x298] sm:$0xff]
        %v426 = vld [vmem:[#allocation7 + $0x2a0] sm:$0xff]
        %v427 = vld [vmem:[#allocation7 + $0x2a8] sm:$0xff]
        %v428 = vld [vmem:[#allocation7 + $0x2b0] sm:$0xff]
        %v429 = vld [vmem:[#allocation7 + $0x2b8] sm:$0xff]
        %v430 = vld [vmem:[#allocation7 + $0x2c0] sm:$0xff]
        %v431 = vld [vmem:[#allocation7 + $0x2c8] sm:$0xff]
        %v432 = vld [vmem:[#allocation7 + $0x2d0] sm:$0xff]
        %v433 = vld [vmem:[#allocation7 + $0x2d8] sm:$0xff]
        %v434 = vld [vmem:[#allocation7 + $0x2e0] sm:$0xff]
        %v435 = vld [vmem:[#allocation7 + $0x2e8] sm:$0xff]
        %v436 = vld [vmem:[#allocation7 + $0x2f0] sm:$0xff]
        %v437 = vld [vmem:[#allocation7 + $0x2f8] sm:$0xff]
        %v438 = vld [vmem:[%s4] sm:$0x3f]
        %v440 = vlaneseq
        %v441 = vshrl.u32 %v440, 7
        %v442 = vsub.s32 0, %v441
        %v443 = vrot.slane %v438, %v442
        %v444 = vlaneseq
        %v445 = vshrl.u32 %v444, 7
        %v446 = vsub.s32 1, %v445
        %v447 = vrot.slane %v438, %v446
        %v448 = vlaneseq
        %v449 = vshrl.u32 %v448, 7
        %v450 = vsub.s32 2, %v449
        %v451 = vrot.slane %v438, %v450
        %v452 = vlaneseq
        %v453 = vshrl.u32 %v452, 7
        %v454 = vsub.s32 3, %v453
        %v455 = vrot.slane %v438, %v454
        %v456 = vlaneseq
        %v457 = vshrl.u32 %v456, 7
        %v458 = vsub.s32 4, %v457
        %v459 = vrot.slane %v438, %v458
        %v460 = vlaneseq
        %v461 = vshrl.u32 %v460, 7
        %v462 = vsub.s32 5, %v461
        %v463 = vrot.slane %v438, %v462
        %v472 = vunpack.c.l.b16 %v340
        %v473 = vunpack.c.h.b16 %v340
        %v474 = vunpack.c.l.b16 %v341
        %v475 = vunpack.c.h.b16 %v341
        %v476 = vpack.c.b16 %v474, %v472
        %v477 = vpack.c.b16 %v475, %v473
        %v576 = vunpack.c.l.b16 %v342
        %v577 = vunpack.c.h.b16 %v342
        %v578 = vunpack.c.l.b16 %v343
        %v579 = vunpack.c.h.b16 %v343
        %v580 = vunpack.c.l.b16 %v344
        %v581 = vunpack.c.h.b16 %v344
        %v582 = vunpack.c.l.b16 %v345
        %v583 = vunpack.c.h.b16 %v345
        %v584 = vunpack.c.l.b16 %v346
        %v585 = vunpack.c.h.b16 %v346
        %v586 = vunpack.c.l.b16 %v347
        %v587 = vunpack.c.h.b16 %v347
        %v588 = vunpack.c.l.b16 %v348
        %v589 = vunpack.c.h.b16 %v348
        %v590 = vunpack.c.l.b16 %v349
        %v591 = vunpack.c.h.b16 %v349
        %v592 = vunpack.c.l.b16 %v350
        %v593 = vunpack.c.h.b16 %v350
        %v594 = vunpack.c.l.b16 %v351
        %v595 = vunpack.c.h.b16 %v351
        %v596 = vunpack.c.l.b16 %v352
        %v597 = vunpack.c.h.b16 %v352
        %v598 = vunpack.c.l.b16 %v353
        %v599 = vunpack.c.h.b16 %v353
        %v600 = vunpack.c.l.b16 %v354
        %v601 = vunpack.c.h.b16 %v354
        %v602 = vunpack.c.l.b16 %v355
        %v603 = vunpack.c.h.b16 %v355
        %v604 = vunpack.c.l.b16 %v356
        %v605 = vunpack.c.h.b16 %v356
        %v606 = vunpack.c.l.b16 %v357
        %v607 = vunpack.c.h.b16 %v357
        %v608 = vunpack.c.l.b16 %v358
        %v609 = vunpack.c.h.b16 %v358
        %v610 = vunpack.c.l.b16 %v359
        %v611 = vunpack.c.h.b16 %v359
        %v612 = vunpack.c.l.b16 %v360
        %v613 = vunpack.c.h.b16 %v360
        %v614 = vunpack.c.l.b16 %v361
        %v615 = vunpack.c.h.b16 %v361
        %v616 = vunpack.c.l.b16 %v362
        %v617 = vunpack.c.h.b16 %v362
        %v618 = vunpack.c.l.b16 %v363
        %v619 = vunpack.c.h.b16 %v363
        %v620 = vunpack.c.l.b16 %v364
        %v621 = vunpack.c.h.b16 %v364
        %v622 = vunpack.c.l.b16 %v365
        %v623 = vunpack.c.h.b16 %v365
        %v624 = vunpack.c.l.b16 %v366
        %v625 = vunpack.c.h.b16 %v366
        %v626 = vunpack.c.l.b16 %v367
        %v627 = vunpack.c.h.b16 %v367
        %v628 = vunpack.c.l.b16 %v368
        %v629 = vunpack.c.h.b16 %v368
        %v630 = vunpack.c.l.b16 %v369
        %v631 = vunpack.c.h.b16 %v369
        %v632 = vunpack.c.l.b16 %v370
        %v633 = vunpack.c.h.b16 %v370
        %v634 = vunpack.c.l.b16 %v371
        %v635 = vunpack.c.h.b16 %v371
        %v636 = vunpack.c.l.b16 %v372
        %v637 = vunpack.c.h.b16 %v372
        %v638 = vunpack.c.l.b16 %v373
        %v639 = vunpack.c.h.b16 %v373
        %v640 = vunpack.c.l.b16 %v374
        %v641 = vunpack.c.h.b16 %v374
        %v642 = vunpack.c.l.b16 %v375
        %v643 = vunpack.c.h.b16 %v375
        %v644 = vunpack.c.l.b16 %v376
        %v645 = vunpack.c.h.b16 %v376
        %v646 = vunpack.c.l.b16 %v377
        %v647 = vunpack.c.h.b16 %v377
        %v648 = vunpack.c.l.b16 %v378
        %v649 = vunpack.c.h.b16 %v378
        %v650 = vunpack.c.l.b16 %v379
        %v651 = vunpack.c.h.b16 %v379
        %v652 = vunpack.c.l.b16 %v380
        %v653 = vunpack.c.h.b16 %v380
        %v654 = vunpack.c.l.b16 %v381
        %v655 = vunpack.c.h.b16 %v381
        %v656 = vunpack.c.l.b16 %v382
        %v657 = vunpack.c.h.b16 %v382
        %v658 = vunpack.c.l.b16 %v383
        %v659 = vunpack.c.h.b16 %v383
        %v660 = vunpack.c.l.b16 %v384
        %v661 = vunpack.c.h.b16 %v384
        %v662 = vunpack.c.l.b16 %v385
        %v663 = vunpack.c.h.b16 %v385
        %v664 = vunpack.c.l.b16 %v386
        %v665 = vunpack.c.h.b16 %v386
        %v666 = vunpack.c.l.b16 %v387
        %v667 = vunpack.c.h.b16 %v387
        %v668 = vunpack.c.l.b16 %v388
        %v669 = vunpack.c.h.b16 %v388
        %v670 = vunpack.c.l.b16 %v389
        %v671 = vunpack.c.h.b16 %v389
        %v672 = vunpack.c.l.b16 %v390
        %v673 = vunpack.c.h.b16 %v390
        %v674 = vunpack.c.l.b16 %v391
        %v675 = vunpack.c.h.b16 %v391
        %v676 = vunpack.c.l.b16 %v392
        %v677 = vunpack.c.h.b16 %v392
        %v678 = vunpack.c.l.b16 %v393
        %v679 = vunpack.c.h.b16 %v393
        %v680 = vunpack.c.l.b16 %v394
        %v681 = vunpack.c.h.b16 %v394
        %v682 = vunpack.c.l.b16 %v395
        %v683 = vunpack.c.h.b16 %v395
        %v684 = vunpack.c.l.b16 %v396
        %v685 = vunpack.c.h.b16 %v396
        %v686 = vunpack.c.l.b16 %v397
        %v687 = vunpack.c.h.b16 %v397
        %v688 = vunpack.c.l.b16 %v398
        %v689 = vunpack.c.h.b16 %v398
        %v690 = vunpack.c.l.b16 %v399
        %v691 = vunpack.c.h.b16 %v399
        %v692 = vunpack.c.l.b16 %v400
        %v693 = vunpack.c.h.b16 %v400
        %v694 = vunpack.c.l.b16 %v401
        %v695 = vunpack.c.h.b16 %v401
        %v696 = vunpack.c.l.b16 %v402
        %v697 = vunpack.c.h.b16 %v402
        %v698 = vunpack.c.l.b16 %v403
        %v699 = vunpack.c.h.b16 %v403
        %v700 = vunpack.c.l.b16 %v404
        %v701 = vunpack.c.h.b16 %v404
        %v702 = vunpack.c.l.b16 %v405
        %v703 = vunpack.c.h.b16 %v405
        %v704 = vunpack.c.l.b16 %v406
        %v705 = vunpack.c.h.b16 %v406
        %v706 = vunpack.c.l.b16 %v407
        %v707 = vunpack.c.h.b16 %v407
        %v708 = vunpack.c.l.b16 %v408
        %v709 = vunpack.c.h.b16 %v408
        %v710 = vunpack.c.l.b16 %v409
        %v711 = vunpack.c.h.b16 %v409
        %v712 = vunpack.c.l.b16 %v410
        %v713 = vunpack.c.h.b16 %v410
        %v714 = vunpack.c.l.b16 %v411
        %v715 = vunpack.c.h.b16 %v411
        %v716 = vunpack.c.l.b16 %v412
        %v717 = vunpack.c.h.b16 %v412
        %v718 = vunpack.c.l.b16 %v413
        %v719 = vunpack.c.h.b16 %v413
        %v720 = vunpack.c.l.b16 %v414
        %v721 = vunpack.c.h.b16 %v414
        %v722 = vunpack.c.l.b16 %v415
        %v723 = vunpack.c.h.b16 %v415
        %v724 = vunpack.c.l.b16 %v416
        %v725 = vunpack.c.h.b16 %v416
        %v726 = vunpack.c.l.b16 %v417
        %v727 = vunpack.c.h.b16 %v417
        %v728 = vunpack.c.l.b16 %v418
        %v729 = vunpack.c.h.b16 %v418
        %v730 = vunpack.c.l.b16 %v419
        %v731 = vunpack.c.h.b16 %v419
        %v732 = vunpack.c.l.b16 %v420
        %v733 = vunpack.c.h.b16 %v420
        %v734 = vunpack.c.l.b16 %v421
        %v735 = vunpack.c.h.b16 %v421
        %v736 = vunpack.c.l.b16 %v422
        %v737 = vunpack.c.h.b16 %v422
        %v738 = vunpack.c.l.b16 %v423
        %v739 = vunpack.c.h.b16 %v423
        %v740 = vunpack.c.l.b16 %v424
        %v741 = vunpack.c.h.b16 %v424
        %v742 = vunpack.c.l.b16 %v425
        %v743 = vunpack.c.h.b16 %v425
        %v744 = vunpack.c.l.b16 %v426
        %v745 = vunpack.c.h.b16 %v426
        %v746 = vunpack.c.l.b16 %v427
        %v747 = vunpack.c.h.b16 %v427
        %v748 = vunpack.c.l.b16 %v428
        %v749 = vunpack.c.h.b16 %v428
        %v750 = vunpack.c.l.b16 %v429
        %v751 = vunpack.c.h.b16 %v429
        %v752 = vunpack.c.l.b16 %v430
        %v753 = vunpack.c.h.b16 %v430
        %v754 = vunpack.c.l.b16 %v431
        %v755 = vunpack.c.h.b16 %v431
        %v756 = vunpack.c.l.b16 %v432
        %v757 = vunpack.c.h.b16 %v432
        %v758 = vunpack.c.l.b16 %v433
        %v759 = vunpack.c.h.b16 %v433
        %v760 = vunpack.c.l.b16 %v434
        %v761 = vunpack.c.h.b16 %v434
        %v762 = vunpack.c.l.b16 %v435
        %v763 = vunpack.c.h.b16 %v435
        %v764 = vunpack.c.l.b16 %v436
        %v765 = vunpack.c.h.b16 %v436
        %v766 = vunpack.c.l.b16 %v437
        %v767 = vunpack.c.h.b16 %v437
        %v768 = vpack.c.b16 %v582, %v576
        %v769 = vpack.c.b16 %v583, %v577
        %v770 = vpack.c.b16 %v584, %v578
        %v771 = vpack.c.b16 %v585, %v579
        %v772 = vpack.c.b16 %v586, %v580
        %v773 = vpack.c.b16 %v587, %v581
        %v774 = vpack.c.b16 %v594, %v588
        %v775 = vpack.c.b16 %v595, %v589
        %v776 = vpack.c.b16 %v596, %v590
        %v777 = vpack.c.b16 %v597, %v591
        %v778 = vpack.c.b16 %v598, %v592
        %v779 = vpack.c.b16 %v599, %v593
        %v780 = vpack.c.b16 %v606, %v600
        %v781 = vpack.c.b16 %v607, %v601
        %v782 = vpack.c.b16 %v608, %v602
        %v783 = vpack.c.b16 %v609, %v603
        %v784 = vpack.c.b16 %v610, %v604
        %v785 = vpack.c.b16 %v611, %v605
        %v786 = vpack.c.b16 %v618, %v612
        %v787 = vpack.c.b16 %v619, %v613
        %v788 = vpack.c.b16 %v620, %v614
        %v789 = vpack.c.b16 %v621, %v615
        %v790 = vpack.c.b16 %v622, %v616
        %v791 = vpack.c.b16 %v623, %v617
        %v792 = vpack.c.b16 %v630, %v624
        %v793 = vpack.c.b16 %v631, %v625
        %v794 = vpack.c.b16 %v632, %v626
        %v795 = vpack.c.b16 %v633, %v627
        %v796 = vpack.c.b16 %v634, %v628
        %v797 = vpack.c.b16 %v635, %v629
        %v798 = vpack.c.b16 %v642, %v636
        %v799 = vpack.c.b16 %v643, %v637
        %v800 = vpack.c.b16 %v644, %v638
        %v801 = vpack.c.b16 %v645, %v639
        %v802 = vpack.c.b16 %v646, %v640
        %v803 = vpack.c.b16 %v647, %v641
        %v804 = vpack.c.b16 %v654, %v648
        %v805 = vpack.c.b16 %v655, %v649
        %v806 = vpack.c.b16 %v656, %v650
        %v807 = vpack.c.b16 %v657, %v651
        %v808 = vpack.c.b16 %v658, %v652
        %v809 = vpack.c.b16 %v659, %v653
        %v810 = vpack.c.b16 %v666, %v660
        %v811 = vpack.c.b16 %v667, %v661
        %v812 = vpack.c.b16 %v668, %v662
        %v813 = vpack.c.b16 %v669, %v663
        %v814 = vpack.c.b16 %v670, %v664
        %v815 = vpack.c.b16 %v671, %v665
        %v816 = vpack.c.b16 %v678, %v672
        %v817 = vpack.c.b16 %v679, %v673
        %v818 = vpack.c.b16 %v680, %v674
        %v819 = vpack.c.b16 %v681, %v675
        %v820 = vpack.c.b16 %v682, %v676
        %v821 = vpack.c.b16 %v683, %v677
        %v822 = vpack.c.b16 %v690, %v684
        %v823 = vpack.c.b16 %v691, %v685
        %v824 = vpack.c.b16 %v692, %v686
        %v825 = vpack.c.b16 %v693, %v687
        %v826 = vpack.c.b16 %v694, %v688
        %v827 = vpack.c.b16 %v695, %v689
        %v828 = vpack.c.b16 %v702, %v696
        %v829 = vpack.c.b16 %v703, %v697
        %v830 = vpack.c.b16 %v704, %v698
        %v831 = vpack.c.b16 %v705, %v699
        %v832 = vpack.c.b16 %v706, %v700
        %v833 = vpack.c.b16 %v707, %v701
        %v834 = vpack.c.b16 %v714, %v708
        %v835 = vpack.c.b16 %v715, %v709
        %v836 = vpack.c.b16 %v716, %v710
        %v837 = vpack.c.b16 %v717, %v711
        %v838 = vpack.c.b16 %v718, %v712
        %v839 = vpack.c.b16 %v719, %v713
        %v840 = vpack.c.b16 %v726, %v720
        %v841 = vpack.c.b16 %v727, %v721
        %v842 = vpack.c.b16 %v728, %v722
        %v843 = vpack.c.b16 %v729, %v723
        %v844 = vpack.c.b16 %v730, %v724
        %v845 = vpack.c.b16 %v731, %v725
        %v846 = vpack.c.b16 %v738, %v732
        %v847 = vpack.c.b16 %v739, %v733
        %v848 = vpack.c.b16 %v740, %v734
        %v849 = vpack.c.b16 %v741, %v735
        %v850 = vpack.c.b16 %v742, %v736
        %v851 = vpack.c.b16 %v743, %v737
        %v852 = vpack.c.b16 %v750, %v744
        %v853 = vpack.c.b16 %v751, %v745
        %v854 = vpack.c.b16 %v752, %v746
        %v855 = vpack.c.b16 %v753, %v747
        %v856 = vpack.c.b16 %v754, %v748
        %v857 = vpack.c.b16 %v755, %v749
        %v858 = vpack.c.b16 %v762, %v756
        %v859 = vpack.c.b16 %v763, %v757
        %v860 = vpack.c.b16 %v764, %v758
        %v861 = vpack.c.b16 %v765, %v759
        %v862 = vpack.c.b16 %v766, %v760
        %v863 = vpack.c.b16 %v767, %v761
        %960 = vmatprep.subr.bf16.mxu0 %v769
        %961 = vmatpush1.bf16.msra.mxu0 %v768
        %962 = vmatprep.subr.bf16.mxu0 %v775
        %963 = vmatpush1.bf16.msra.mxu0 %v774
        %964 = vmatprep.subr.bf16.mxu0 %v781
        %965 = vmatpush1.bf16.msra.mxu0 %v780
        %966 = vmatprep.subr.bf16.mxu0 %v787
        %967 = vmatpush1.bf16.msra.mxu0 %v786
        %968 = vmatprep.subr.bf16.mxu0 %v793
        %969 = vmatpush1.bf16.msra.mxu0 %v792
        %970 = vmatprep.subr.bf16.mxu0 %v799
        %971 = vmatpush1.bf16.msra.mxu0 %v798
        %972 = vmatprep.subr.bf16.mxu0 %v805
        %973 = vmatpush1.bf16.msra.mxu0 %v804
        %974 = vmatprep.subr.bf16.mxu0 %v811
        %975 = vmatpush1.bf16.msra.mxu0 %v810
        %976 = vmatprep.subr.bf16.mxu0 %v817
        %977 = vmatpush1.bf16.msra.mxu0 %v816
        %978 = vmatprep.subr.bf16.mxu0 %v823
        %979 = vmatpush1.bf16.msra.mxu0 %v822
        %980 = vmatprep.subr.bf16.mxu0 %v829
        %981 = vmatpush1.bf16.msra.mxu0 %v828
        %982 = vmatprep.subr.bf16.mxu0 %v835
        %983 = vmatpush1.bf16.msra.mxu0 %v834
        %984 = vmatprep.subr.bf16.mxu0 %v841
        %985 = vmatpush1.bf16.msra.mxu0 %v840
        %986 = vmatprep.subr.bf16.mxu0 %v847
        %987 = vmatpush1.bf16.msra.mxu0 %v846
        %988 = vmatprep.subr.bf16.mxu0 %v853
        %989 = vmatpush1.bf16.msra.mxu0 %v852
        %990 = vmatprep.subr.bf16.mxu0 %v859
        %991 = vmatpush1.bf16.msra.mxu0 %v858
        %992 = vmatprep.mubr.bf16.mxu0 %v477
        %993 = vmatmul.mubr.bf16.gmra.mrb[0].mxu0 %v476
        %v994 = vpop.f32.mrb[0].mxu0
        %v995 = vadd.f32 %v443, %v994
        %v996 = vpop.f32.mrb[0].mxu0
        %v997 = vadd.f32 %v447, %v996
        %v998 = vpop.f32.mrb[0].mxu0
        %v999 = vadd.f32 %v443, %v998
        %v1000 = vpop.f32.mrb[0].mxu0
        %v1001 = vadd.f32 %v447, %v1000
        %1002 = vdwg.mxu0
        %1003 = vmatprep.subr.bf16.mxu0 %v771
        %1004 = vmatpush1.bf16.msra.mxu0 %v770
        %1005 = vmatprep.subr.bf16.mxu0 %v777
        %1006 = vmatpush1.bf16.msra.mxu0 %v776
        %1007 = vmatprep.subr.bf16.mxu0 %v783
        %1008 = vmatpush1.bf16.msra.mxu0 %v782
        %1009 = vmatprep.subr.bf16.mxu0 %v789
        %1010 = vmatpush1.bf16.msra.mxu0 %v788
        %1011 = vmatprep.subr.bf16.mxu0 %v795
        %1012 = vmatpush1.bf16.msra.mxu0 %v794
        %1013 = vmatprep.subr.bf16.mxu0 %v801
        %1014 = vmatpush1.bf16.msra.mxu0 %v800
        %1015 = vmatprep.subr.bf16.mxu0 %v807
        %1016 = vmatpush1.bf16.msra.mxu0 %v806
        %1017 = vmatprep.subr.bf16.mxu0 %v813
        %1018 = vmatpush1.bf16.msra.mxu0 %v812
        %1019 = vmatprep.subr.bf16.mxu0 %v819
        %1020 = vmatpush1.bf16.msra.mxu0 %v818
        %1021 = vmatprep.subr.bf16.mxu0 %v825
        %1022 = vmatpush1.bf16.msra.mxu0 %v824
        %1023 = vmatprep.subr.bf16.mxu0 %v831
        %1024 = vmatpush1.bf16.msra.mxu0 %v830
        %1025 = vmatprep.subr.bf16.mxu0 %v837
        %1026 = vmatpush1.bf16.msra.mxu0 %v836
        %1027 = vmatprep.subr.bf16.mxu0 %v843
        %1028 = vmatpush1.bf16.msra.mxu0 %v842
        %1029 = vmatprep.subr.bf16.mxu0 %v849
        %1030 = vmatpush1.bf16.msra.mxu0 %v848
        %1031 = vmatprep.subr.bf16.mxu0 %v855
        %1032 = vmatpush1.bf16.msra.mxu0 %v854
        %1033 = vmatprep.subr.bf16.mxu0 %v861
        %1034 = vmatpush1.bf16.msra.mxu0 %v860
        %1035 = vmatprep.mubr.bf16.mxu0 %v477
        %1036 = vmatmul.mubr.bf16.gmra.mrb[0].mxu0 %v476
        %v1037 = vpop.f32.mrb[0].mxu0
        %v1038 = vadd.f32 %v451, %v1037
        %v1039 = vpop.f32.mrb[0].mxu0
        %v1040 = vadd.f32 %v455, %v1039
        %v1041 = vpop.f32.mrb[0].mxu0
        %v1042 = vadd.f32 %v451, %v1041
        %v1043 = vpop.f32.mrb[0].mxu0
        %v1044 = vadd.f32 %v455, %v1043
        %1045 = vdwg.mxu0
        %1046 = vmatprep.subr.bf16.mxu0 %v773
        %1047 = vmatpush1.bf16.msra.mxu0 %v772
        %1048 = vmatprep.subr.bf16.mxu0 %v779
        %1049 = vmatpush1.bf16.msra.mxu0 %v778
        %1050 = vmatprep.subr.bf16.mxu0 %v785
        %1051 = vmatpush1.bf16.msra.mxu0 %v784
        %1052 = vmatprep.subr.bf16.mxu0 %v791
        %1053 = vmatpush1.bf16.msra.mxu0 %v790
        %1054 = vmatprep.subr.bf16.mxu0 %v797
        %1055 = vmatpush1.bf16.msra.mxu0 %v796
        %1056 = vmatprep.subr.bf16.mxu0 %v803
        %1057 = vmatpush1.bf16.msra.mxu0 %v802
        %1058 = vmatprep.subr.bf16.mxu0 %v809
        %1059 = vmatpush1.bf16.msra.mxu0 %v808
        %1060 = vmatprep.subr.bf16.mxu0 %v815
        %1061 = vmatpush1.bf16.msra.mxu0 %v814
        %1062 = vmatprep.subr.bf16.mxu0 %v821
        %1063 = vmatpush1.bf16.msra.mxu0 %v820
        %1064 = vmatprep.subr.bf16.mxu0 %v827
        %1065 = vmatpush1.bf16.msra.mxu0 %v826
        %1066 = vmatprep.subr.bf16.mxu0 %v833
        %1067 = vmatpush1.bf16.msra.mxu0 %v832
        %1068 = vmatprep.subr.bf16.mxu0 %v839
        %1069 = vmatpush1.bf16.msra.mxu0 %v838
        %1070 = vmatprep.subr.bf16.mxu0 %v845
        %1071 = vmatpush1.bf16.msra.mxu0 %v844
        %1072 = vmatprep.subr.bf16.mxu0 %v851
        %1073 = vmatpush1.bf16.msra.mxu0 %v850
        %1074 = vmatprep.subr.bf16.mxu0 %v857
        %1075 = vmatpush1.bf16.msra.mxu0 %v856
        %1076 = vmatprep.subr.bf16.mxu0 %v863
        %1077 = vmatpush1.bf16.msra.mxu0 %v862
        %1078 = vmatprep.mubr.bf16.mxu0 %v477
        %1079 = vmatmul.mubr.bf16.gmra.mrb[0].mxu0 %v476
        %v1080 = vpop.f32.mrb[0].mxu0
        %v1081 = vadd.f32 %v459, %v1080
        %v1082 = vpop.f32.mrb[0].mxu0
        %v1083 = vadd.f32 %v463, %v1082
        %v1084 = vpop.f32.mrb[0].mxu0
        %v1085 = vadd.f32 %v459, %v1084
        %v1086 = vpop.f32.mrb[0].mxu0
        %v1087 = vadd.f32 %v463, %v1086
        %1088 = vdwg.mxu0
        %v1089 = vpack.c.bf16 %v999, %v995
        %v1090 = vpack.c.bf16 %v1042, %v1038
        %v1091 = vpack.c.bf16 %v1085, %v1081
        %1092 = vmatprep.subr.bf16.mxu0 0
        %1093 = vmatpush1.bf16.xpose.msra.mxu0 %v1090
        %1094 = vmatprep.subr.bf16.mxu0 0
        %1095 = vmatpush1.bf16.xpose.msra.mxu0 0
        %1096 = vmatprep.subr.bf16.mxu0 0
        %1097 = vmatpush1.bf16.xpose.msra.mxu0 0
        %1098 = vmatprep.subr.bf16.mxu0 0
        %1099 = vmatpush1.bf16.xpose.msra.mxu0 0
        %1100 = vmatprep.subr.bf16.mxu0 0
        %1101 = vmatpush1.bf16.xpose.msra.mxu0 0
        %1102 = vmatprep.subr.bf16.mxu0 0
        %1103 = vmatpush1.bf16.xpose.msra.mxu0 0
        %1104 = vmatprep.subr.bf16.mxu0 0
        %1105 = vmatpush1.bf16.xpose.msra.mxu0 0
        %1106 = vmatprep.subr.bf16.mxu0 0
        %1107 = vmatpush1.bf16.xpose.msra.mxu0 0
        %1108 = vmatprep.subr.bf16.mxu0 0
        %1109 = vmatpush1.bf16.xpose.msra.mxu0 0
        %1110 = vmatprep.subr.bf16.mxu0 0
        %1111 = vmatpush1.bf16.xpose.msra.mxu0 0
        %1112 = vmatprep.subr.bf16.mxu0 0
        %1113 = vmatpush1.bf16.xpose.msra.mxu0 0
        %1114 = vmatprep.subr.bf16.mxu0 0
        %1115 = vmatpush1.bf16.xpose.msra.mxu0 0
        %1116 = vmatprep.subr.bf16.mxu0 0
        %1117 = vmatpush1.bf16.xpose.msra.mxu0 0
        %1118 = vmatprep.subr.bf16.mxu0 0
        %1119 = vmatpush1.bf16.xpose.msra.mxu0 0
        %1120 = vmatprep.subr.bf16.mxu0 0
        %1121 = vmatpush1.bf16.xpose.msra.mxu0 0
        %1122 = vmatprep.subr.bf16.mxu0 0
        %1123 = vmatpush1.bf16.xpose.msra.mxu0 0
        %1124 = vmatprep.mubr.bf16.mxu0 0
        %1125 = vmatmul.mubr.bf16.gmra.mrb[0].mxu0 %v1089
        %v1126 = vpop.f32.mrb[0].mxu0
        %v1127 = vadd.f32 0.0, %v1126
        %v1128 = vpop.f32.mrb[0].mxu0
        %v1129 = vpop.f32.mrb[0].mxu0
        %v1130 = vadd.f32 0.0, %v1129
        %v1131 = vpop.f32.mrb[0].mxu0
        %1132 = vdwg.mxu0
        %vm1133 = vcmask 130048
        %v1134 = vsel %vm1133, %v1127, -inf
        %1135 = vmax.xlane.f32.xlu0 %v1134
        %v1136 = vpop.xlane.xlu0 %1135
        %v1137 = vsel %vm1133, %v1130, -inf
        %1138 = vmax.xlane.f32.xlu0 %v1137
        %v1139 = vpop.xlane.xlu0 %1138
        %v1140 = vsub.f32 %v1127, %v1136
        %v1141 = vsub.f32 %v1130, %v1139
        %v1142 = vmul.f32 %v1140, 1.442695
        %v1143 = vpow.pop %v1142
        %v1144 = vmul.f32 %v1141, 1.442695
        %v1145 = vpow.pop %v1144
        %v1146 = vsel %vm1133, %v1143, 0.0
        %1147 = vadd.xlane.f32.xlu0 %v1146
        %v1148 = vpop.xlane.xlu0 %1147
        %v1149 = vsel %vm1133, %v1145, 0.0
        %1150 = vadd.xlane.f32.xlu0 %v1149
        %v1151 = vpop.xlane.xlu0 %1150
        %v1152 = vpack.c.bf16 %v1145, %v1143
        %v1154 = vsel %vm1133, %v1152, 0
        %1156 = vmatprep.subr.bf16.mxu0 0
        %1157 = vmatpush1.bf16.msra.mxu0 %v1091
        %1158 = vmatprep.subr.bf16.mxu0 0
        %1159 = vmatpush1.bf16.msra.mxu0 0
        %1160 = vmatprep.subr.bf16.mxu0 0
        %1161 = vmatpush1.bf16.msra.mxu0 0
        %1162 = vmatprep.subr.bf16.mxu0 0
        %1163 = vmatpush1.bf16.msra.mxu0 0
        %1164 = vmatprep.subr.bf16.mxu0 0
        %1165 = vmatpush1.bf16.msra.mxu0 0
        %1166 = vmatprep.subr.bf16.mxu0 0
        %1167 = vmatpush1.bf16.msra.mxu0 0
        %1168 = vmatprep.subr.bf16.mxu0 0
        %1169 = vmatpush1.bf16.msra.mxu0 0
        %1170 = vmatprep.subr.bf16.mxu0 0
        %1171 = vmatpush1.bf16.msra.mxu0 0
        %1172 = vmatprep.subr.bf16.mxu0 0
        %1173 = vmatpush1.bf16.msra.mxu0 0
        %1174 = vmatprep.subr.bf16.mxu0 0
        %1175 = vmatpush1.bf16.msra.mxu0 0
        %1176 = vmatprep.subr.bf16.mxu0 0
        %1177 = vmatpush1.bf16.msra.mxu0 0
        %1178 = vmatprep.subr.bf16.mxu0 0
        %1179 = vmatpush1.bf16.msra.mxu0 0
        %1180 = vmatprep.subr.bf16.mxu0 0
        %1181 = vmatpush1.bf16.msra.mxu0 0
        %1182 = vmatprep.subr.bf16.mxu0 0
        %1183 = vmatpush1.bf16.msra.mxu0 0
        %1184 = vmatprep.subr.bf16.mxu0 0
        %1185 = vmatpush1.bf16.msra.mxu0 0
        %1186 = vmatprep.subr.bf16.mxu0 0
        %1187 = vmatpush1.bf16.msra.mxu0 0
        %1188 = vmatprep.mubr.bf16.mxu0 0
        %1189 = vmatmul.mubr.bf16.gmra.mrb[0].mxu0 %v1154
        %v1190 = vpop.f32.mrb[0].mxu0
        %v1191 = vadd.f32 0.0, %v1190
        %v1192 = vpop.f32.mrb[0].mxu0
        %v1193 = vpop.f32.mrb[0].mxu0
        %v1194 = vadd.f32 0.0, %v1193
        %v1195 = vpop.f32.mrb[0].mxu0
        %1196 = vdwg.mxu0
        %v1197 = vrcp.pop %v1148
        %v1198 = vrcp.pop %v1151
        %v1199 = vmul.f32 %v1191, %v1197
        %v1200 = vmul.f32 %v1194, %v1198
        %v1201 = vpack.c.bf16 %v1200, %v1199
        %v1202 = vld [vmem:[#allocation8] sm:$0xff]
        %v1203 = vld [vmem:[#allocation8 + $0x8] sm:$0xff]
        %v1204 = vld [vmem:[#allocation8 + $0x10] sm:$0xff]
        %v1205 = vld [vmem:[#allocation8 + $0x18] sm:$0xff]
        %v1206 = vld [vmem:[#allocation8 + $0x20] sm:$0xff]
        %v1207 = vld [vmem:[#allocation8 + $0x28] sm:$0xff]
        %v1208 = vld [vmem:[#allocation8 + $0x30] sm:$0xff]
        %v1209 = vld [vmem:[#allocation8 + $0x38] sm:$0xff]
        %v1210 = vld [vmem:[#allocation8 + $0x40] sm:$0xff]
        %v1211 = vld [vmem:[#allocation8 + $0x48] sm:$0xff]
        %v1212 = vld [vmem:[#allocation8 + $0x50] sm:$0xff]
        %v1213 = vld [vmem:[#allocation8 + $0x58] sm:$0xff]
        %v1214 = vld [vmem:[#allocation8 + $0x60] sm:$0xff]
        %v1215 = vld [vmem:[#allocation8 + $0x68] sm:$0xff]
        %v1216 = vld [vmem:[#allocation8 + $0x70] sm:$0xff]
        %v1217 = vld [vmem:[#allocation8 + $0x78] sm:$0xff]
        %v1218 = vpack.c.bf16 %v1001, %v997
        %v1219 = vpack.c.bf16 %v1044, %v1040
        %v1220 = vpack.c.bf16 %v1087, %v1083
        %1221 = vmatprep.subr.bf16.mxu0 0
        %1222 = vmatpush1.bf16.xpose.msra.mxu0 %v1219
        %1223 = vmatprep.subr.bf16.mxu0 0
        %1224 = vmatpush1.bf16.xpose.msra.mxu0 0
        %1225 = vmatprep.subr.bf16.mxu0 0
        %1226 = vmatpush1.bf16.xpose.msra.mxu0 0
        %1227 = vmatprep.subr.bf16.mxu0 0
        %1228 = vmatpush1.bf16.xpose.msra.mxu0 0
        %1229 = vmatprep.subr.bf16.mxu0 0
        %1230 = vmatpush1.bf16.xpose.msra.mxu0 0
        %1231 = vmatprep.subr.bf16.mxu0 0
        %1232 = vmatpush1.bf16.xpose.msra.mxu0 0
        %1233 = vmatprep.subr.bf16.mxu0 0
        %1234 = vmatpush1.bf16.xpose.msra.mxu0 0
        %1235 = vmatprep.subr.bf16.mxu0 0
        %1236 = vmatpush1.bf16.xpose.msra.mxu0 0
        %1237 = vmatprep.subr.bf16.mxu0 0
        %1238 = vmatpush1.bf16.xpose.msra.mxu0 0
        %1239 = vmatprep.subr.bf16.mxu0 0
        %1240 = vmatpush1.bf16.xpose.msra.mxu0 0
        %1241 = vmatprep.subr.bf16.mxu0 0
        %1242 = vmatpush1.bf16.xpose.msra.mxu0 0
        %1243 = vmatprep.subr.bf16.mxu0 0
        %1244 = vmatpush1.bf16.xpose.msra.mxu0 0
        %1245 = vmatprep.subr.bf16.mxu0 0
        %1246 = vmatpush1.bf16.xpose.msra.mxu0 0
        %1247 = vmatprep.subr.bf16.mxu0 0
        %1248 = vmatpush1.bf16.xpose.msra.mxu0 0
        %1249 = vmatprep.subr.bf16.mxu0 0
        %1250 = vmatpush1.bf16.xpose.msra.mxu0 0
        %1251 = vmatprep.subr.bf16.mxu0 0
        %1252 = vmatpush1.bf16.xpose.msra.mxu0 0
        %1253 = vmatprep.mubr.bf16.mxu0 0
        %1254 = vmatmul.mubr.bf16.gmra.mrb[0].mxu0 %v1218
        %v1255 = vpop.f32.mrb[0].mxu0
        %v1256 = vadd.f32 0.0, %v1255
        %v1257 = vpop.f32.mrb[0].mxu0
        %v1258 = vpop.f32.mrb[0].mxu0
        %v1259 = vadd.f32 0.0, %v1258
        %v1260 = vpop.f32.mrb[0].mxu0
        %1261 = vdwg.mxu0
        %v1262 = vsel %vm1133, %v1256, -inf
        %1263 = vmax.xlane.f32.xlu0 %v1262
        %v1264 = vpop.xlane.xlu0 %1263
        %v1265 = vsel %vm1133, %v1259, -inf
        %1266 = vmax.xlane.f32.xlu0 %v1265
        %v1267 = vpop.xlane.xlu0 %1266
        %v1268 = vsub.f32 %v1256, %v1264
        %v1269 = vsub.f32 %v1259, %v1267
        %v1270 = vmul.f32 %v1268, 1.442695
        %v1271 = vpow.pop %v1270
        %v1272 = vmul.f32 %v1269, 1.442695
        %v1273 = vpow.pop %v1272
        %v1274 = vsel %vm1133, %v1271, 0.0
        %1275 = vadd.xlane.f32.xlu0 %v1274
        %v1276 = vpop.xlane.xlu0 %1275
        %v1277 = vsel %vm1133, %v1273, 0.0
        %1278 = vadd.xlane.f32.xlu0 %v1277
        %v1279 = vpop.xlane.xlu0 %1278
        %v1280 = vpack.c.bf16 %v1273, %v1271
        %v1282 = vsel %vm1133, %v1280, 0
        %1284 = vmatprep.subr.bf16.mxu0 0
        %1285 = vmatpush1.bf16.msra.mxu0 %v1220
        %1286 = vmatprep.subr.bf16.mxu0 0
        %1287 = vmatpush1.bf16.msra.mxu0 0
        %1288 = vmatprep.subr.bf16.mxu0 0
        %1289 = vmatpush1.bf16.msra.mxu0 0
        %1290 = vmatprep.subr.bf16.mxu0 0
        %1291 = vmatpush1.bf16.msra.mxu0 0
        %1292 = vmatprep.subr.bf16.mxu0 0
        %1293 = vmatpush1.bf16.msra.mxu0 0
        %1294 = vmatprep.subr.bf16.mxu0 0
        %1295 = vmatpush1.bf16.msra.mxu0 0
        %1296 = vmatprep.subr.bf16.mxu0 0
        %1297 = vmatpush1.bf16.msra.mxu0 0
        %1298 = vmatprep.subr.bf16.mxu0 0
        %1299 = vmatpush1.bf16.msra.mxu0 0
        %1300 = vmatprep.subr.bf16.mxu0 0
        %1301 = vmatpush1.bf16.msra.mxu0 0
        %1302 = vmatprep.subr.bf16.mxu0 0
        %1303 = vmatpush1.bf16.msra.mxu0 0
        %1304 = vmatprep.subr.bf16.mxu0 0
        %1305 = vmatpush1.bf16.msra.mxu0 0
        %1306 = vmatprep.subr.bf16.mxu0 0
        %1307 = vmatpush1.bf16.msra.mxu0 0
        %1308 = vmatprep.subr.bf16.mxu0 0
        %1309 = vmatpush1.bf16.msra.mxu0 0
        %1310 = vmatprep.subr.bf16.mxu0 0
        %1311 = vmatpush1.bf16.msra.mxu0 0
        %1312 = vmatprep.subr.bf16.mxu0 0
        %1313 = vmatpush1.bf16.msra.mxu0 0
        %1314 = vmatprep.subr.bf16.mxu0 0
        %1315 = vmatpush1.bf16.msra.mxu0 0
        %1316 = vmatprep.mubr.bf16.mxu0 0
        %1317 = vmatmul.mubr.bf16.gmra.mrb[0].mxu0 %v1282
        %v1318 = vpop.f32.mrb[0].mxu0
        %v1319 = vadd.f32 0.0, %v1318
        %v1320 = vpop.f32.mrb[0].mxu0
        %v1321 = vpop.f32.mrb[0].mxu0
        %v1322 = vadd.f32 0.0, %v1321
        %v1323 = vpop.f32.mrb[0].mxu0
        %1324 = vdwg.mxu0
        %v1325 = vrcp.pop %v1276
        %v1326 = vrcp.pop %v1279
        %v1327 = vmul.f32 %v1319, %v1325
        %v1328 = vmul.f32 %v1322, %v1326
        %v1329 = vpack.c.bf16 %v1328, %v1327
        %v1330 = vld [vmem:[#allocation8 + $0x80] sm:$0xff]
        %v1331 = vld [vmem:[#allocation8 + $0x88] sm:$0xff]
        %v1332 = vld [vmem:[#allocation8 + $0x90] sm:$0xff]
        %v1333 = vld [vmem:[#allocation8 + $0x98] sm:$0xff]
        %v1334 = vld [vmem:[#allocation8 + $0xa0] sm:$0xff]
        %v1335 = vld [vmem:[#allocation8 + $0xa8] sm:$0xff]
        %v1336 = vld [vmem:[#allocation8 + $0xb0] sm:$0xff]
        %v1337 = vld [vmem:[#allocation8 + $0xb8] sm:$0xff]
        %v1338 = vld [vmem:[#allocation8 + $0xc0] sm:$0xff]
        %v1339 = vld [vmem:[#allocation8 + $0xc8] sm:$0xff]
        %v1340 = vld [vmem:[#allocation8 + $0xd0] sm:$0xff]
        %v1341 = vld [vmem:[#allocation8 + $0xd8] sm:$0xff]
        %v1342 = vld [vmem:[#allocation8 + $0xe0] sm:$0xff]
        %v1343 = vld [vmem:[#allocation8 + $0xe8] sm:$0xff]
        %v1344 = vld [vmem:[#allocation8 + $0xf0] sm:$0xff]
        %v1345 = vld [vmem:[#allocation8 + $0xf8] sm:$0xff]
        %v1362 = vunpack.c.l.b16 %v1330
        %v1363 = vunpack.c.h.b16 %v1330
        %v1364 = vunpack.c.l.b16 %v1331
        %v1365 = vunpack.c.h.b16 %v1331
        %v1366 = vunpack.c.l.b16 %v1332
        %v1367 = vunpack.c.h.b16 %v1332
        %v1368 = vunpack.c.l.b16 %v1333
        %v1369 = vunpack.c.h.b16 %v1333
        %v1370 = vunpack.c.l.b16 %v1334
        %v1371 = vunpack.c.h.b16 %v1334
        %v1372 = vunpack.c.l.b16 %v1335
        %v1373 = vunpack.c.h.b16 %v1335
        %v1374 = vunpack.c.l.b16 %v1336
        %v1375 = vunpack.c.h.b16 %v1336
        %v1376 = vunpack.c.l.b16 %v1337
        %v1377 = vunpack.c.h.b16 %v1337
        %v1378 = vunpack.c.l.b16 %v1338
        %v1379 = vunpack.c.h.b16 %v1338
        %v1380 = vunpack.c.l.b16 %v1339
        %v1381 = vunpack.c.h.b16 %v1339
        %v1382 = vunpack.c.l.b16 %v1340
        %v1383 = vunpack.c.h.b16 %v1340
        %v1384 = vunpack.c.l.b16 %v1341
        %v1385 = vunpack.c.h.b16 %v1341
        %v1386 = vunpack.c.l.b16 %v1342
        %v1387 = vunpack.c.h.b16 %v1342
        %v1388 = vunpack.c.l.b16 %v1343
        %v1389 = vunpack.c.h.b16 %v1343
        %v1390 = vunpack.c.l.b16 %v1344
        %v1391 = vunpack.c.h.b16 %v1344
        %v1392 = vunpack.c.l.b16 %v1345
        %v1393 = vunpack.c.h.b16 %v1345
        %v1394 = vpack.c.b16 %v1364, %v1362
        %v1395 = vpack.c.b16 %v1365, %v1363
        %v1396 = vpack.c.b16 %v1368, %v1366
        %v1397 = vpack.c.b16 %v1369, %v1367
        %v1398 = vpack.c.b16 %v1372, %v1370
        %v1399 = vpack.c.b16 %v1373, %v1371
        %v1400 = vpack.c.b16 %v1376, %v1374
        %v1401 = vpack.c.b16 %v1377, %v1375
        %v1402 = vpack.c.b16 %v1380, %v1378
        %v1403 = vpack.c.b16 %v1381, %v1379
        %v1404 = vpack.c.b16 %v1384, %v1382
        %v1405 = vpack.c.b16 %v1385, %v1383
        %v1406 = vpack.c.b16 %v1388, %v1386
        %v1407 = vpack.c.b16 %v1389, %v1387
        %v1408 = vpack.c.b16 %v1392, %v1390
        %v1409 = vpack.c.b16 %v1393, %v1391
        %1426 = vmatprep.subr.bf16.mxu0 %v1395
        %1427 = vmatpush1.bf16.msra.mxu0 %v1394
        %1428 = vmatprep.subr.bf16.mxu0 %v1397
        %1429 = vmatpush1.bf16.msra.mxu0 %v1396
        %1430 = vmatprep.subr.bf16.mxu0 %v1399
        %1431 = vmatpush1.bf16.msra.mxu0 %v1398
        %1432 = vmatprep.subr.bf16.mxu0 %v1401
        %1433 = vmatpush1.bf16.msra.mxu0 %v1400
        %1434 = vmatprep.subr.bf16.mxu0 %v1403
        %1435 = vmatpush1.bf16.msra.mxu0 %v1402
        %1436 = vmatprep.subr.bf16.mxu0 %v1405
        %1437 = vmatpush1.bf16.msra.mxu0 %v1404
        %1438 = vmatprep.subr.bf16.mxu0 %v1407
        %1439 = vmatpush1.bf16.msra.mxu0 %v1406
        %1440 = vmatprep.subr.bf16.mxu0 %v1409
        %1441 = vmatpush1.bf16.msra.mxu0 %v1408
        %1442 = vmatprep.subr.bf16.mxu0 0
        %1443 = vmatpush1.bf16.msra.mxu0 0
        %1444 = vmatprep.subr.bf16.mxu0 0
        %1445 = vmatpush1.bf16.msra.mxu0 0
        %1446 = vmatprep.subr.bf16.mxu0 0
        %1447 = vmatpush1.bf16.msra.mxu0 0
        %1448 = vmatprep.subr.bf16.mxu0 0
        %1449 = vmatpush1.bf16.msra.mxu0 0
        %1450 = vmatprep.subr.bf16.mxu0 0
        %1451 = vmatpush1.bf16.msra.mxu0 0
        %1452 = vmatprep.subr.bf16.mxu0 0
        %1453 = vmatpush1.bf16.msra.mxu0 0
        %1454 = vmatprep.subr.bf16.mxu0 0
        %1455 = vmatpush1.bf16.msra.mxu0 0
        %1456 = vmatprep.subr.bf16.mxu0 0
        %1457 = vmatpush1.bf16.msra.mxu0 0
        %1458 = vmatprep.mubr.bf16.mxu0 0
        %1459 = vmatmul.mubr.bf16.gmra.mrb[0].mxu0 %v1329
        %v1460 = vpop.f32.mrb[0].mxu0
        %v1461 = vadd.f32 0.0, %v1460
        %v1462 = vpop.f32.mrb[0].mxu0
        %v1463 = vadd.f32 0.0, %v1462
        %v1464 = vpop.f32.mrb[0].mxu0
        %v1465 = vadd.f32 0.0, %v1464
        %v1466 = vpop.f32.mrb[0].mxu0
        %v1467 = vadd.f32 0.0, %v1466
        %1468 = vdwg.mxu0
        %v1485 = vunpack.c.l.b16 %v1202
        %v1486 = vunpack.c.h.b16 %v1202
        %v1487 = vunpack.c.l.b16 %v1203
        %v1488 = vunpack.c.h.b16 %v1203
        %v1489 = vunpack.c.l.b16 %v1204
        %v1490 = vunpack.c.h.b16 %v1204
        %v1491 = vunpack.c.l.b16 %v1205
        %v1492 = vunpack.c.h.b16 %v1205
        %v1493 = vunpack.c.l.b16 %v1206
        %v1494 = vunpack.c.h.b16 %v1206
        %v1495 = vunpack.c.l.b16 %v1207
        %v1496 = vunpack.c.h.b16 %v1207
        %v1497 = vunpack.c.l.b16 %v1208
        %v1498 = vunpack.c.h.b16 %v1208
        %v1499 = vunpack.c.l.b16 %v1209
        %v1500 = vunpack.c.h.b16 %v1209
        %v1501 = vunpack.c.l.b16 %v1210
        %v1502 = vunpack.c.h.b16 %v1210
        %v1503 = vunpack.c.l.b16 %v1211
        %v1504 = vunpack.c.h.b16 %v1211
        %v1505 = vunpack.c.l.b16 %v1212
        %v1506 = vunpack.c.h.b16 %v1212
        %v1507 = vunpack.c.l.b16 %v1213
        %v1508 = vunpack.c.h.b16 %v1213
        %v1509 = vunpack.c.l.b16 %v1214
        %v1510 = vunpack.c.h.b16 %v1214
        %v1511 = vunpack.c.l.b16 %v1215
        %v1512 = vunpack.c.h.b16 %v1215
        %v1513 = vunpack.c.l.b16 %v1216
        %v1514 = vunpack.c.h.b16 %v1216
        %v1515 = vunpack.c.l.b16 %v1217
        %v1516 = vunpack.c.h.b16 %v1217
        %v1517 = vpack.c.b16 %v1487, %v1485
        %v1518 = vpack.c.b16 %v1488, %v1486
        %v1519 = vpack.c.b16 %v1491, %v1489
        %v1520 = vpack.c.b16 %v1492, %v1490
        %v1521 = vpack.c.b16 %v1495, %v1493
        %v1522 = vpack.c.b16 %v1496, %v1494
        %v1523 = vpack.c.b16 %v1499, %v1497
        %v1524 = vpack.c.b16 %v1500, %v1498
        %v1525 = vpack.c.b16 %v1503, %v1501
        %v1526 = vpack.c.b16 %v1504, %v1502
        %v1527 = vpack.c.b16 %v1507, %v1505
        %v1528 = vpack.c.b16 %v1508, %v1506
        %v1529 = vpack.c.b16 %v1511, %v1509
        %v1530 = vpack.c.b16 %v1512, %v1510
        %v1531 = vpack.c.b16 %v1515, %v1513
        %v1532 = vpack.c.b16 %v1516, %v1514
        %1549 = vmatprep.subr.bf16.mxu0 %v1518
        %1550 = vmatpush1.bf16.msra.mxu0 %v1517
        %1551 = vmatprep.subr.bf16.mxu0 %v1520
        %1552 = vmatpush1.bf16.msra.mxu0 %v1519
        %1553 = vmatprep.subr.bf16.mxu0 %v1522
        %1554 = vmatpush1.bf16.msra.mxu0 %v1521
        %1555 = vmatprep.subr.bf16.mxu0 %v1524
        %1556 = vmatpush1.bf16.msra.mxu0 %v1523
        %1557 = vmatprep.subr.bf16.mxu0 %v1526
        %1558 = vmatpush1.bf16.msra.mxu0 %v1525
        %1559 = vmatprep.subr.bf16.mxu0 %v1528
        %1560 = vmatpush1.bf16.msra.mxu0 %v1527
        %1561 = vmatprep.subr.bf16.mxu0 %v1530
        %1562 = vmatpush1.bf16.msra.mxu0 %v1529
        %1563 = vmatprep.subr.bf16.mxu0 %v1532
        %1564 = vmatpush1.bf16.msra.mxu0 %v1531
        %1565 = vmatprep.subr.bf16.mxu0 0
        %1566 = vmatpush1.bf16.msra.mxu0 0
        %1567 = vmatprep.subr.bf16.mxu0 0
        %1568 = vmatpush1.bf16.msra.mxu0 0
        %1569 = vmatprep.subr.bf16.mxu0 0
        %1570 = vmatpush1.bf16.msra.mxu0 0
        %1571 = vmatprep.subr.bf16.mxu0 0
        %1572 = vmatpush1.bf16.msra.mxu0 0
        %1573 = vmatprep.subr.bf16.mxu0 0
        %1574 = vmatpush1.bf16.msra.mxu0 0
        %1575 = vmatprep.subr.bf16.mxu0 0
        %1576 = vmatpush1.bf16.msra.mxu0 0
        %1577 = vmatprep.subr.bf16.mxu0 0
        %1578 = vmatpush1.bf16.msra.mxu0 0
        %1579 = vmatprep.subr.bf16.mxu0 0
        %1580 = vmatpush1.bf16.msra.mxu0 0
        %1581 = vmatprep.mubr.bf16.mxu0 0
        %1582 = vmatmul.mubr.bf16.gmra.mrb[0].mxu0 %v1201
        %v1583 = vpop.f32.mrb[0].mxu0
        %v1584 = vadd.f32 %v1461, %v1583
        %v1585 = vpop.f32.mrb[0].mxu0
        %v1586 = vadd.f32 %v1463, %v1585
        %v1587 = vpop.f32.mrb[0].mxu0
        %v1588 = vadd.f32 %v1465, %v1587
        %v1589 = vpop.f32.mrb[0].mxu0
        %v1590 = vadd.f32 %v1467, %v1589
        %1591 = vdwg.mxu0
        %v1592 = vld [vmem:[%s297] sm:$0xff]
        %v1593 = vld [vmem:[%s297 + $0x8] sm:$0xff]
        %v1594 = vld [vmem:[%s297 + $0x10] sm:$0xff]
        %v1595 = vld [vmem:[%s297 + $0x18] sm:$0xff]
        %v1596 = vadd.f32 %v1592, %v1584
        %v1597 = vadd.f32 %v1593, %v1586
        %v1598 = vadd.f32 %v1594, %v1588
        %v1599 = vadd.f32 %v1595, %v1590
        %v1600 = vld [vmem:[%s5] sm:$0x3]
        %v1602 = vlaneseq
        %v1603 = vshrl.u32 %v1602, 7
        %v1604 = vsub.s32 0, %v1603
        %v1605 = vrot.slane %v1600, %v1604
        %v1606 = vlaneseq
        %v1607 = vshrl.u32 %v1606, 7
        %v1608 = vsub.s32 1, %v1607
        %v1609 = vrot.slane %v1600, %v1608
        %v1612 = vadd.f32 %v1596, %v1605
        %v1613 = vadd.f32 %v1597, %v1609
        %v1614 = vadd.f32 %v1598, %v1605
        %v1615 = vadd.f32 %v1599, %v1609
        %1616 = vst [vmem:[%s338] sm:$0xff] %v1612
        %1617 = vst [vmem:[%s338 + $0x8] sm:$0xff] %v1613
        %1618 = vst [vmem:[%s338 + $0x10] sm:$0xff] %v1614
        %1619 = vst [vmem:[%s338 + $0x18] sm:$0xff] %v1615
        %s1620 = sand.u32 %s171, 1
        %s1621 = scalar_lea.sflag [#allocation4], %s1620
        %s1622 = sand.u32 %s171, 1
        %s1623 = smul.addr %s1622, 32
        %s1624 = scalar_lea.vmem [#allocation10], %s1623
        // Predicated region
        $region61: #{tpu_custom_call.1} parent=43 // pred_check
          %p1625 = pneg %p181
        $region62: #{tpu_custom_call.1} parent=43 // pred_check_branch
          %1627 = sbr.rel (%p1625) target = $region64
        $region63: #{tpu_custom_call.1} parent=43 // pred_region
          %s1629 = ssub.s32 512, 512
          %1630 = vsyncadd %s1621, %s1629
          %s1631 = smul.addr %s27, 4
          %s1632 = smul.addr %s1631, 128
          %s1633 = scalar_lea.hbm %s6, %s1632
          %s1634 = sshll.u32 %s1624, 4
          %s1635 = int_to_ptr.vmem [resolvable:$true] %s1634
          %1640 = dma.vmem_to_hbm [thread:$0]  %s1635, 512, %s1633, %s1621, 256, 256, 16
        $region64: #{tpu_custom_call.1} parent=43 // pred_fallthru
          _
      $region44: #{tpu_custom_call.1} parent=5 // pred_fallthru
        _
      %p1641 = scmp.le.s32.totalorder 2, %s22
      // Predicated region
      $region65: #{tpu_custom_call.1} parent=5 // pred_check
        %p1642 = pneg %p1641
      $region66: #{tpu_custom_call.1} parent=5 // pred_check_branch
        %1644 = sbr.rel (%p1642) target = $region68
      $region67: #{tpu_custom_call.1} parent=5 // pred_region
        %s1645 = ssub.s32 %s22, 2
        // Predicated region
        $region69: #{tpu_custom_call.1} parent=67 // pred_check
          %p1646 = pneg %p187
        $region70: #{tpu_custom_call.1} parent=67 // pred_check_branch
          %1648 = sbr.rel (%p1646) target = $region72
        $region71: #{tpu_custom_call.1} parent=67 // pred_region
          %s1649 = sand.u32 %s172, 1
          %s1650 = scalar_lea.sflag [#allocation4], %s1649
          %s1651 = sand.u32 %s172, 1
          %s1652 = smul.addr %s1651, 32
          %s1653 = scalar_lea.vmem [#allocation10], %s1652
          %1654 = dma.done %s1650, 512
        $region72: #{tpu_custom_call.1} parent=67 // pred_fallthru
          _
      $region68: #{tpu_custom_call.1} parent=5 // pred_fallthru
        _
    $region6: #{tpu_custom_call.1} parent=1 // loop_footer
      %s26 = sadd.s32 1, %s22
    $region7: #{tpu_custom_call.1} parent=1 // loop_footer_branch
      %21 = sbr.rel target = $region3
    $region8: #{tpu_custom_call.1} parent=1 // loop_exit
      _
    %1655 = vsyncpa [#allocation3], 1
    %s1656 = scalar_lea.sflag [#allocation3], 1
    %1657 = vsyncpa %s1656, 1
    %1658 = vsyncpa [#allocation6], 1
    %s1659 = scalar_lea.sflag [#allocation6], 1
    %1660 = vsyncpa %s1659, 1
    %1661 = vsyncpa [#allocation9], 1
    %1662 = vsyncpa [#allocation4], 1
    %s1663 = scalar_lea.sflag [#allocation4], 1
    %1664 = vsyncpa %s1663, 1

</llo_original>
